<compile_context>
chip_gen: v7x
topology: tpu7x:2x2x1
jax: 0.10.0
libtpu: 0.0.40
codegen_flags: <defaults>
</compile_context>

<pallas_src>
import itertools

import jax
import jax.numpy as jnp
from jax.experimental import pallas as pl
from jax.experimental.pallas import tpu as pltpu

_MiB = 1 << 20
_LANE = 128
_TINY = 8 * 128          # below ~1 vreg of data, XLA's relayout wins


def _inverse(perm):
    inv = [0, 0, 0]
    for i, p in enumerate(perm):
        inv[p] = i
    return tuple(inv)


def _chip_vmem_bytes():
    """Physical VMEM per core; conservative fallback = v7x per-TensorCore (64 MiB)."""
    try:
        cap = int(pltpu.get_tpu_info().vmem_capacity_bytes)
        if cap > 0:
            return cap
    except Exception:  # any failure -> conservative default
        pass
    return 64 * _MiB


def _budgets():
    """(tile_budget, tile_hard_cap, vmem_ceiling) per chip generation."""
    cap = _chip_vmem_bytes()
    if cap >= 96 * _MiB:          # v5e / v6e class: 128 MiB VMEM per core
        vmem_ceiling = 80 * _MiB
    else:                          # v7x class (64 MiB per TensorCore) or unknown
        vmem_ceiling = 44 * _MiB
    # Up to ~5 resident tile buffers (2x input, 2-3x output) + compiler scratch.
    tile_hard_cap = (vmem_ceiling - 12 * _MiB) // 5
    tile_budget = min(4 * _MiB, tile_hard_cap)
    return tile_budget, tile_hard_cap, vmem_ceiling


def _pick_tile(s, cap, align):
    """Aligned tile <= cap for a dim of size s.

    Exact divisors of s (no masked edge blocks) score best; otherwise the tile
    maximising `t * efficiency^2` balances long DMA rows against edge padding.
    """
    cap = min(cap, s)
    cap -= cap % align
    if cap <= align:
        return align
    best_t, best_key = align, -1.0
    for t in range(align, cap + 1, align):
        blocks = -(-s // t)
        eff = s / float(blocks * t)          # 1.0 => divides exactly
        key = t * eff * eff
        if key > best_key:
            best_t, best_key = t, key
    return best_t


def _tile_plan(shape, perm, itemsize, budget_bytes):
    """Per-ORIGINAL-axis tile sizes.

    Both the input block (original order) and the output block (permuted order)
    must have last-two dims that are (sublane, 128) multiples or the full dim.
    Lane axes (minor of either layout) get long 128-multiple tiles (lane-dense
    stores, long DMA rows); second-minor-only axes get sublane-multiple tiles;
    axes that stay major in both layouts get a small batch tile.  Tiles shrink,
    output-lane axis last, until one tile fits the budget.
    """
    lane_axes = {2, perm[2]}                       # minor axis of input / output
    sub_axes = {1, perm[1]} - lane_axes            # second-minor-only axes
    sub_align = max(8, 32 // max(1, itemsize))     # 8 f32, 16 bf16, 32 int8
    lane_cap = max(4 * _LANE, 8192 // max(1, itemsize))   # ~8 KiB of minor bytes

    tiles, aligns, splittable = [], [], []
    for d, s in enumerate(shape):
        if d in lane_axes:
            if s % _LANE == 0:
                t, a, sp = _pick_tile(s, lane_cap, _LANE), _LANE, True
            else:
                t, a, sp = s, s, False             # full-extent escape hatch
        elif d in sub_axes:
            if s % sub_align == 0:
                t, a, sp = _pick_tile(s, 512, sub_align), sub_align, True
            else:
                t, a, sp = s, s, False
        else:                                      # major in both layouts
            t, a, sp = _pick_tile(s, 8, 1), 1, True
        tiles.append(t)
        aligns.append(a)
        splittable.append(sp)

    def nbytes():
        return tiles[0] * tiles[1] * tiles[2] * itemsize

    out_lane = perm[2]
    while nbytes() > budget_bytes:
        cands = [d for d in range(3) if splittable[d] and tiles[d] > aligns[d]]
        if not cands:
            break
        # Shrink the output-lane axis only as a last resort (lane-dense stores).
        pref = [d for d in cands if d != out_lane] or cands
        d = max(pref, key=lambda ax: tiles[ax])
        tiles[d] = _pick_tile(shape[d], max(aligns[d], tiles[d] // 2), aligns[d])
    return tiles


def _make_kernel(perm):
    if perm == (0, 2, 1):
        def kernel(x_ref, o_ref):
            # Only the minor (sublane, lane) pair moves: batched XLU transpose.
            o_ref[...] = jnp.swapaxes(x_ref[...], 1, 2)
    elif perm == (1, 0, 2):
        def kernel(x_ref, o_ref):
            # Lane axis untouched: outer-pair shuffle; the heavy lifting is DMA.
            # TODO(synk): for itemsize < 4, bitcast lane-adjacent pairs to uint32
            # before the swap to halve the sublane-shuffle work.
            o_ref[...] = jnp.swapaxes(x_ref[...], 0, 1)
    else:
        def kernel(x_ref, o_ref):
            # Lane axis moves: per-tile transpose, hidden under the HBM DMA.
            # TODO(synk): evaluate pltpu.einshape here if the XLU slot ever
            # becomes the binding unit (most likely on v7x).
            o_ref[...] = jnp.transpose(x_ref[...], perm)
    return kernel


def permute3d(x, dim0, dim1, dim2):
    """Pallas equivalent of Permute3D(dim0, dim1, dim2)(x) for rank-3 x."""
    assert x.ndim == 3, "Permute3D expects a rank-3 tensor"
    perm = (dim0, dim1, dim2)
    assert sorted(perm) == [0, 1, 2], "perm must be a permutation of (0, 1, 2)"

    if perm == (0, 1, 2):
        # torch .permute(0,1,2) is a zero-copy view; nothing to compute.
        return x

    itemsize = jnp.dtype(x.dtype).itemsize
    if x.size <= _TINY:
        # Sub-vreg problem: per-step overhead + masked stores make Pallas slower.
        return jnp.transpose(x, perm)

    budget, hard_cap, vmem_ceiling = _budgets()
    tiles = _tile_plan(x.shape, perm, itemsize, budget)
    tile_bytes = tiles[0] * tiles[1] * tiles[2] * itemsize
    if tile_bytes > hard_cap:
        # Badly unaligned dims forced a near-whole-array tile; let XLA handle it.
        return jnp.transpose(x, perm)

    inv = _inverse(perm)
    out_shape = tuple(x.shape[p] for p in perm)
    out_tiles = tuple(tiles[p] for p in perm)
    nblocks = tuple(pl.cdiv(out_shape[d], out_tiles[d]) for d in range(3))

    # Megacore-friendly grid ordering: the axis with the most blocks leads, so a
    # leading "parallel" axis has work for both v7x TensorCores.
    order = sorted(range(3), key=lambda d: -nblocks[d])
    pos = tuple(order.index(d) for d in range(3))
    grid = tuple(nblocks[d] for d in order)
    total_blocks = grid[0] * grid[1] * grid[2]

    def out_index_map(i, j, k, pos=pos):
        g = (i, j, k)
        return (g[pos[0]], g[pos[1]], g[pos[2]])

    def in_index_map(i, j, k, pos=pos, inv=inv):
        g = (i, j, k)
        return (g[pos[inv[0]]], g[pos[inv[1]]], g[pos[inv[2]]])

    def build(deep_out):
        out_bufs = 3 if deep_out else 2
        resident = tile_bytes * (2 + out_bufs)      # 2x input + N x output buffers
        vmem_limit = int(min(vmem_ceiling, max(24 * _MiB, resident + 16 * _MiB)))

        out_spec = None
        if deep_out and hasattr(pl, "Buffered"):
            try:
                out_spec = pl.BlockSpec(out_tiles, out_index_map,
                                        pipeline_mode=pl.Buffered(3))
            except TypeError:
                out_spec = None
        if out_spec is None:
            out_spec = pl.BlockSpec(out_tiles, out_index_map)

        return pl.pallas_call(
            _make_kernel(perm),
            out_shape=jax.ShapeDtypeStruct(out_shape, x.dtype),
            grid=grid,
            in_specs=[pl.BlockSpec(tuple(tiles), in_index_map)],
            out_specs=out_spec,
            compiler_params=pltpu.CompilerParams(
                dimension_semantics=("parallel", "parallel", "parallel"),
                vmem_limit_bytes=vmem_limit),
            cost_estimate=pl.CostEstimate(
                flops=0, transcendentals=0,
                bytes_accessed=2 * x.size * itemsize),
        )

    # Deeper output buffering hides per-step writeback latency (mostly a v7x
    # win) when the lane axis moves; fall back to plain double-buffering if the
    # installed JAX/Mosaic rejects it.
    deep = (perm[2] != 2) and (total_blocks >= 3)
    if deep:
        try:
            return build(True)(x)
        except Exception:
            pass
    return build(False)(x)


if __name__ == "__main__":
    key = jax.random.PRNGKey(0)
    cases = [
        ((4, 256, 512), jnp.float32),    # aligned dims, Pallas path (small)
        ((8, 256, 2048), jnp.float32),   # multi-block grid, exercises pipelining
        ((3, 2176, 256), jnp.float32),   # non-divisible tile -> masked edge blocks
        ((5, 257, 192), jnp.float32),    # unaligned dims -> full-extent blocks
        ((4, 8, 16), jnp.float32),       # tiny input (original module example)
    ]
    for shape, dtype in cases:
        key, sub = jax.random.split(key)
        x = jax.random.normal(sub, shape, dtype=dtype)
        for perm in itertools.permutations((0, 1, 2)):
            out = jax.block_until_ready(permute3d(x, *perm))
            ref = jnp.transpose(x, perm)
            assert out.shape == ref.shape, (shape, perm, out.shape, ref.shape)
            assert out.dtype == ref.dtype, (shape, perm, out.dtype, ref.dtype)
            assert bool(jnp.array_equal(out, ref)), f"mismatch shape={shape} perm={perm}"

    print("KERNEL_OK")
</pallas_src>

<mosaic_0001>
module attributes {stable_mosaic.version = 11 : i64} {
  func.func @kernel(%arg0: i32, %arg1: i32, %arg2: i32, %arg3: memref<4x256x512xf32, #tpu.memory_space<vmem>>, %arg4: memref<4x512x256xf32, #tpu.memory_space<vmem>>) attributes {dimension_semantics = [#tpu.dimension_semantics<parallel>, #tpu.dimension_semantics<parallel>, #tpu.dimension_semantics<parallel>], iteration_bounds = array<i64: 1, 1, 1>, scalar_prefetch = 0 : i64, scratch_operands = 0 : i64, tpu.core_type = #tpu.core_type<tc>, window_params = [{transform_indices = @transform_0, window_bounds = array<i64: 4, 256, 512>}, {transform_indices = @transform_1, window_bounds = array<i64: 4, 512, 256>}]} {
    %c0 = arith.constant 0 : index
    %c0_0 = arith.constant 0 : index
    %c0_1 = arith.constant 0 : index
    %0 = vector.load %arg3[%c0, %c0_0, %c0_1] : memref<4x256x512xf32, #tpu.memory_space<vmem>>, vector<4x256x512xf32>
    %1 = tpu.transpose %0, [0, 2, 1] : vector<4x256x512xf32> -> vector<4x512x256xf32>
    %c0_2 = arith.constant 0 : index
    %c0_3 = arith.constant 0 : index
    %c0_4 = arith.constant 0 : index
    %2 = vector.load %arg4[%c0_2, %c0_3, %c0_4] : memref<4x512x256xf32, #tpu.memory_space<vmem>>, vector<4x512x256xf32>
    tpu.vector_store %arg4[%c0_2, %c0_3, %c0_4], %1 {strides = array<i32>} : memref<4x512x256xf32, #tpu.memory_space<vmem>>, vector<4x512x256xf32>,
    return
  }
  func.func @transform_0(%arg0: i32, %arg1: i32, %arg2: i32) -> (i32, i32, i32) {
    %c0_i32 = arith.constant 0 : i32
    return %arg0, %arg2, %arg1 : i32, i32, i32
  }
  func.func @transform_1(%arg0: i32, %arg1: i32, %arg2: i32) -> (i32, i32, i32) {
    %c0_i32 = arith.constant 0 : i32
    return %arg0, %arg1, %arg2 : i32, i32, i32
  }
}

</mosaic_0001>

<llo_original>
// kernel: tpu_custom_call.1
$region0: #{tpu_custom_call.1}
  #allocation0 [shape = 'u32[]', space=smem, size = 0x4, offset = 0x4, fixed_abs, tag = 'smem constant byte address 0x4 - core index']
  #allocation1 [shape = 'u32[144,128]{1,0:T(1,128)}', space=vmem, size = 0x12000, scoped, tag = 'internal scratch']
  %s0 = inlined_call_operand.hbm [shape: f32[4,256,512], index: 0, kind: input, shape index: {}]
  %s1 = inlined_call_operand.hbm [shape: f32[4,512,256], index: 1, kind: output, shape index: {}]
  %s2 = sld [smem:[#allocation0]]
  $region18: #{tpu_custom_call.1} parent=0
    _
  %s4 = ssub.s32 1, %s2
  %s5 = scalar_select 0, %s4, %s2
  $region1: #{tpu_custom_call.1} parent=0
    #allocation2 [shape = 'u8[2097152]{0}', space=vmem, size = 0x200000, scoped, tag = 'input window, operand 0, single buffered']
    #allocation3 [shape = 's32[1]{0}', space=sflag, size = 0x4, scoped, tag = 'scoped memory for tpu_custom_call.1']
    #allocation4 [shape = 's32[1]{0}', space=sflag, size = 0x4, scoped, tag = 'scoped memory for tpu_custom_call.1']
    #allocation5 [shape = 'u8[2097152]{0}', space=vmem, size = 0x200000, scoped, tag = 'output window, operand 0, single buffered']
    %6 = vsyncpa [#allocation3], 0
    %7 = vsyncpa [#allocation4], 0
    // Predicated region
    $region2: #{tpu_custom_call.1} parent=1 // pred_check
      _
    $region3: #{tpu_custom_call.1} parent=1 // pred_check_branch
      %9 = sbr.rel (0) target = $region5
    $region4: #{tpu_custom_call.1} parent=1 // pred_region
      %s11 = ssub.s32 65536, 65536
      %12 = vsyncadd [#allocation3], %s11
      %s13 = sshll.u32 [#allocation2], 4
      %s14 = int_to_ptr.vmem [resolvable:$true] %s13
      %19 = dma.hbm_to_vmem [thread:$0]  %s0, 65536, %s14, [#allocation3], 512, 512, 32
    $region5: #{tpu_custom_call.1} parent=1 // pred_fallthru
      _
    // Predicated region
    $region6: #{tpu_custom_call.1} parent=1 // pred_check
      _
    $region7: #{tpu_custom_call.1} parent=1 // pred_check_branch
      %21 = sbr.rel (0) target = $region9
    $region8: #{tpu_custom_call.1} parent=1 // pred_region
      %22 = dma.done [#allocation3], 65536
    $region9: #{tpu_custom_call.1} parent=1 // pred_fallthru
      _
    %v23 = vld [vmem:[#allocation2] sm:$0xff]
    %v24 = vld [vmem:[#allocation2 + $0x8] sm:$0xff]
    %v25 = vld [vmem:[#allocation2 + $0x10] sm:$0xff]
    %v26 = vld [vmem:[#allocation2 + $0x18] sm:$0xff]
    %v27 = vld [vmem:[#allocation2 + $0x20] sm:$0xff]
    %v28 = vld [vmem:[#allocation2 + $0x28] sm:$0xff]
    %v29 = vld [vmem:[#allocation2 + $0x30] sm:$0xff]
    %v30 = vld [vmem:[#allocation2 + $0x38] sm:$0xff]
    %v31 = vld [vmem:[#allocation2 + $0x40] sm:$0xff]
    %v32 = vld [vmem:[#allocation2 + $0x48] sm:$0xff]
    %v33 = vld [vmem:[#allocation2 + $0x50] sm:$0xff]
    %v34 = vld [vmem:[#allocation2 + $0x58] sm:$0xff]
    %v35 = vld [vmem:[#allocation2 + $0x60] sm:$0xff]
    %v36 = vld [vmem:[#allocation2 + $0x68] sm:$0xff]
    %v37 = vld [vmem:[#allocation2 + $0x70] sm:$0xff]
    %v38 = vld [vmem:[#allocation2 + $0x78] sm:$0xff]
    %v39 = vld [vmem:[#allocation2 + $0x80] sm:$0xff]
    %v40 = vld [vmem:[#allocation2 + $0x88] sm:$0xff]
    %v41 = vld [vmem:[#allocation2 + $0x90] sm:$0xff]
    %v42 = vld [vmem:[#allocation2 + $0x98] sm:$0xff]
    %v43 = vld [vmem:[#allocation2 + $0xa0] sm:$0xff]
    %v44 = vld [vmem:[#allocation2 + $0xa8] sm:$0xff]
    %v45 = vld [vmem:[#allocation2 + $0xb0] sm:$0xff]
    %v46 = vld [vmem:[#allocation2 + $0xb8] sm:$0xff]
    %v47 = vld [vmem:[#allocation2 + $0xc0] sm:$0xff]
    %v48 = vld [vmem:[#allocation2 + $0xc8] sm:$0xff]
    %v49 = vld [vmem:[#allocation2 + $0xd0] sm:$0xff]
    %v50 = vld [vmem:[#allocation2 + $0xd8] sm:$0xff]
    %v51 = vld [vmem:[#allocation2 + $0xe0] sm:$0xff]
    %v52 = vld [vmem:[#allocation2 + $0xe8] sm:$0xff]
    %v53 = vld [vmem:[#allocation2 + $0xf0] sm:$0xff]
    %v54 = vld [vmem:[#allocation2 + $0xf8] sm:$0xff]
    %v55 = vld [vmem:[#allocation2 + $0x100] sm:$0xff]
    %v56 = vld [vmem:[#allocation2 + $0x108] sm:$0xff]
    %v57 = vld [vmem:[#allocation2 + $0x110] sm:$0xff]
    %v58 = vld [vmem:[#allocation2 + $0x118] sm:$0xff]
    %v59 = vld [vmem:[#allocation2 + $0x120] sm:$0xff]
    %v60 = vld [vmem:[#allocation2 + $0x128] sm:$0xff]
    %v61 = vld [vmem:[#allocation2 + $0x130] sm:$0xff]
    %v62 = vld [vmem:[#allocation2 + $0x138] sm:$0xff]
    %v63 = vld [vmem:[#allocation2 + $0x140] sm:$0xff]
    %v64 = vld [vmem:[#allocation2 + $0x148] sm:$0xff]
    %v65 = vld [vmem:[#allocation2 + $0x150] sm:$0xff]
    %v66 = vld [vmem:[#allocation2 + $0x158] sm:$0xff]
    %v67 = vld [vmem:[#allocation2 + $0x160] sm:$0xff]
    %v68 = vld [vmem:[#allocation2 + $0x168] sm:$0xff]
    %v69 = vld [vmem:[#allocation2 + $0x170] sm:$0xff]
    %v70 = vld [vmem:[#allocation2 + $0x178] sm:$0xff]
    %v71 = vld [vmem:[#allocation2 + $0x180] sm:$0xff]
    %v72 = vld [vmem:[#allocation2 + $0x188] sm:$0xff]
    %v73 = vld [vmem:[#allocation2 + $0x190] sm:$0xff]
    %v74 = vld [vmem:[#allocation2 + $0x198] sm:$0xff]
    %v75 = vld [vmem:[#allocation2 + $0x1a0] sm:$0xff]
    %v76 = vld [vmem:[#allocation2 + $0x1a8] sm:$0xff]
    %v77 = vld [vmem:[#allocation2 + $0x1b0] sm:$0xff]
    %v78 = vld [vmem:[#allocation2 + $0x1b8] sm:$0xff]
    %v79 = vld [vmem:[#allocation2 + $0x1c0] sm:$0xff]
    %v80 = vld [vmem:[#allocation2 + $0x1c8] sm:$0xff]
    %v81 = vld [vmem:[#allocation2 + $0x1d0] sm:$0xff]
    %v82 = vld [vmem:[#allocation2 + $0x1d8] sm:$0xff]
    %v83 = vld [vmem:[#allocation2 + $0x1e0] sm:$0xff]
    %v84 = vld [vmem:[#allocation2 + $0x1e8] sm:$0xff]
    %v85 = vld [vmem:[#allocation2 + $0x1f0] sm:$0xff]
    %v86 = vld [vmem:[#allocation2 + $0x1f8] sm:$0xff]
    %v87 = vld [vmem:[#allocation2 + $0x200] sm:$0xff]
    %v88 = vld [vmem:[#allocation2 + $0x208] sm:$0xff]
    %v89 = vld [vmem:[#allocation2 + $0x210] sm:$0xff]
    %v90 = vld [vmem:[#allocation2 + $0x218] sm:$0xff]
    %v91 = vld [vmem:[#allocation2 + $0x220] sm:$0xff]
    %v92 = vld [vmem:[#allocation2 + $0x228] sm:$0xff]
    %v93 = vld [vmem:[#allocation2 + $0x230] sm:$0xff]
    %v94 = vld [vmem:[#allocation2 + $0x238] sm:$0xff]
    %v95 = vld [vmem:[#allocation2 + $0x240] sm:$0xff]
    %v96 = vld [vmem:[#allocation2 + $0x248] sm:$0xff]
    %v97 = vld [vmem:[#allocation2 + $0x250] sm:$0xff]
    %v98 = vld [vmem:[#allocation2 + $0x258] sm:$0xff]
    %v99 = vld [vmem:[#allocation2 + $0x260] sm:$0xff]
    %v100 = vld [vmem:[#allocation2 + $0x268] sm:$0xff]
    %v101 = vld [vmem:[#allocation2 + $0x270] sm:$0xff]
    %v102 = vld [vmem:[#allocation2 + $0x278] sm:$0xff]
    %v103 = vld [vmem:[#allocation2 + $0x280] sm:$0xff]
    %v104 = vld [vmem:[#allocation2 + $0x288] sm:$0xff]
    %v105 = vld [vmem:[#allocation2 + $0x290] sm:$0xff]
    %v106 = vld [vmem:[#allocation2 + $0x298] sm:$0xff]
    %v107 = vld [vmem:[#allocation2 + $0x2a0] sm:$0xff]
    %v108 = vld [vmem:[#allocation2 + $0x2a8] sm:$0xff]
    %v109 = vld [vmem:[#allocation2 + $0x2b0] sm:$0xff]
    %v110 = vld [vmem:[#allocation2 + $0x2b8] sm:$0xff]
    %v111 = vld [vmem:[#allocation2 + $0x2c0] sm:$0xff]
    %v112 = vld [vmem:[#allocation2 + $0x2c8] sm:$0xff]
    %v113 = vld [vmem:[#allocation2 + $0x2d0] sm:$0xff]
    %v114 = vld [vmem:[#allocation2 + $0x2d8] sm:$0xff]
    %v115 = vld [vmem:[#allocation2 + $0x2e0] sm:$0xff]
    %v116 = vld [vmem:[#allocation2 + $0x2e8] sm:$0xff]
    %v117 = vld [vmem:[#allocation2 + $0x2f0] sm:$0xff]
    %v118 = vld [vmem:[#allocation2 + $0x2f8] sm:$0xff]
    %v119 = vld [vmem:[#allocation2 + $0x300] sm:$0xff]
    %v120 = vld [vmem:[#allocation2 + $0x308] sm:$0xff]
    %v121 = vld [vmem:[#allocation2 + $0x310] sm:$0xff]
    %v122 = vld [vmem:[#allocation2 + $0x318] sm:$0xff]
    %v123 = vld [vmem:[#allocation2 + $0x320] sm:$0xff]
    %v124 = vld [vmem:[#allocation2 + $0x328] sm:$0xff]
    %v125 = vld [vmem:[#allocation2 + $0x330] sm:$0xff]
    %v126 = vld [vmem:[#allocation2 + $0x338] sm:$0xff]
    %v127 = vld [vmem:[#allocation2 + $0x340] sm:$0xff]
    %v128 = vld [vmem:[#allocation2 + $0x348] sm:$0xff]
    %v129 = vld [vmem:[#allocation2 + $0x350] sm:$0xff]
    %v130 = vld [vmem:[#allocation2 + $0x358] sm:$0xff]
    %v131 = vld [vmem:[#allocation2 + $0x360] sm:$0xff]
    %v132 = vld [vmem:[#allocation2 + $0x368] sm:$0xff]
    %v133 = vld [vmem:[#allocation2 + $0x370] sm:$0xff]
    %v134 = vld [vmem:[#allocation2 + $0x378] sm:$0xff]
    %v135 = vld [vmem:[#allocation2 + $0x380] sm:$0xff]
    %v136 = vld [vmem:[#allocation2 + $0x388] sm:$0xff]
    %v137 = vld [vmem:[#allocation2 + $0x390] sm:$0xff]
    %v138 = vld [vmem:[#allocation2 + $0x398] sm:$0xff]
    %v139 = vld [vmem:[#allocation2 + $0x3a0] sm:$0xff]
    %v140 = vld [vmem:[#allocation2 + $0x3a8] sm:$0xff]
    %v141 = vld [vmem:[#allocation2 + $0x3b0] sm:$0xff]
    %v142 = vld [vmem:[#allocation2 + $0x3b8] sm:$0xff]
    %v143 = vld [vmem:[#allocation2 + $0x3c0] sm:$0xff]
    %v144 = vld [vmem:[#allocation2 + $0x3c8] sm:$0xff]
    %v145 = vld [vmem:[#allocation2 + $0x3d0] sm:$0xff]
    %v146 = vld [vmem:[#allocation2 + $0x3d8] sm:$0xff]
    %v147 = vld [vmem:[#allocation2 + $0x3e0] sm:$0xff]
    %v148 = vld [vmem:[#allocation2 + $0x3e8] sm:$0xff]
    %v149 = vld [vmem:[#allocation2 + $0x3f0] sm:$0xff]
    %v150 = vld [vmem:[#allocation2 + $0x3f8] sm:$0xff]
    %v151 = vld [vmem:[#allocation2 + $0x400] sm:$0xff]
    %v152 = vld [vmem:[#allocation2 + $0x408] sm:$0xff]
    %v153 = vld [vmem:[#allocation2 + $0x410] sm:$0xff]
    %v154 = vld [vmem:[#allocation2 + $0x418] sm:$0xff]
    %v155 = vld [vmem:[#allocation2 + $0x420] sm:$0xff]
    %v156 = vld [vmem:[#allocation2 + $0x428] sm:$0xff]
    %v157 = vld [vmem:[#allocation2 + $0x430] sm:$0xff]
    %v158 = vld [vmem:[#allocation2 + $0x438] sm:$0xff]
    %v159 = vld [vmem:[#allocation2 + $0x440] sm:$0xff]
    %v160 = vld [vmem:[#allocation2 + $0x448] sm:$0xff]
    %v161 = vld [vmem:[#allocation2 + $0x450] sm:$0xff]
    %v162 = vld [vmem:[#allocation2 + $0x458] sm:$0xff]
    %v163 = vld [vmem:[#allocation2 + $0x460] sm:$0xff]
    %v164 = vld [vmem:[#allocation2 + $0x468] sm:$0xff]
    %v165 = vld [vmem:[#allocation2 + $0x470] sm:$0xff]
    %v166 = vld [vmem:[#allocation2 + $0x478] sm:$0xff]
    %v167 = vld [vmem:[#allocation2 + $0x480] sm:$0xff]
    %v168 = vld [vmem:[#allocation2 + $0x488] sm:$0xff]
    %v169 = vld [vmem:[#allocation2 + $0x490] sm:$0xff]
    %v170 = vld [vmem:[#allocation2 + $0x498] sm:$0xff]
    %v171 = vld [vmem:[#allocation2 + $0x4a0] sm:$0xff]
    %v172 = vld [vmem:[#allocation2 + $0x4a8] sm:$0xff]
    %v173 = vld [vmem:[#allocation2 + $0x4b0] sm:$0xff]
    %v174 = vld [vmem:[#allocation2 + $0x4b8] sm:$0xff]
    %v175 = vld [vmem:[#allocation2 + $0x4c0] sm:$0xff]
    %v176 = vld [vmem:[#allocation2 + $0x4c8] sm:$0xff]
    %v177 = vld [vmem:[#allocation2 + $0x4d0] sm:$0xff]
    %v178 = vld [vmem:[#allocation2 + $0x4d8] sm:$0xff]
    %v179 = vld [vmem:[#allocation2 + $0x4e0] sm:$0xff]
    %v180 = vld [vmem:[#allocation2 + $0x4e8] sm:$0xff]
    %v181 = vld [vmem:[#allocation2 + $0x4f0] sm:$0xff]
    %v182 = vld [vmem:[#allocation2 + $0x4f8] sm:$0xff]
    %v183 = vld [vmem:[#allocation2 + $0x500] sm:$0xff]
    %v184 = vld [vmem:[#allocation2 + $0x508] sm:$0xff]
    %v185 = vld [vmem:[#allocation2 + $0x510] sm:$0xff]
    %v186 = vld [vmem:[#allocation2 + $0x518] sm:$0xff]
    %v187 = vld [vmem:[#allocation2 + $0x520] sm:$0xff]
    %v188 = vld [vmem:[#allocation2 + $0x528] sm:$0xff]
    %v189 = vld [vmem:[#allocation2 + $0x530] sm:$0xff]
    %v190 = vld [vmem:[#allocation2 + $0x538] sm:$0xff]
    %v191 = vld [vmem:[#allocation2 + $0x540] sm:$0xff]
    %v192 = vld [vmem:[#allocation2 + $0x548] sm:$0xff]
    %v193 = vld [vmem:[#allocation2 + $0x550] sm:$0xff]
    %v194 = vld [vmem:[#allocation2 + $0x558] sm:$0xff]
    %v195 = vld [vmem:[#allocation2 + $0x560] sm:$0xff]
    %v196 = vld [vmem:[#allocation2 + $0x568] sm:$0xff]
    %v197 = vld [vmem:[#allocation2 + $0x570] sm:$0xff]
    %v198 = vld [vmem:[#allocation2 + $0x578] sm:$0xff]
    %v199 = vld [vmem:[#allocation2 + $0x580] sm:$0xff]
    %v200 = vld [vmem:[#allocation2 + $0x588] sm:$0xff]
    %v201 = vld [vmem:[#allocation2 + $0x590] sm:$0xff]
    %v202 = vld [vmem:[#allocation2 + $0x598] sm:$0xff]
    %v203 = vld [vmem:[#allocation2 + $0x5a0] sm:$0xff]
    %v204 = vld [vmem:[#allocation2 + $0x5a8] sm:$0xff]
    %v205 = vld [vmem:[#allocation2 + $0x5b0] sm:$0xff]
    %v206 = vld [vmem:[#allocation2 + $0x5b8] sm:$0xff]
    %v207 = vld [vmem:[#allocation2 + $0x5c0] sm:$0xff]
    %v208 = vld [vmem:[#allocation2 + $0x5c8] sm:$0xff]
    %v209 = vld [vmem:[#allocation2 + $0x5d0] sm:$0xff]
    %v210 = vld [vmem:[#allocation2 + $0x5d8] sm:$0xff]
    %v211 = vld [vmem:[#allocation2 + $0x5e0] sm:$0xff]
    %v212 = vld [vmem:[#allocation2 + $0x5e8] sm:$0xff]
    %v213 = vld [vmem:[#allocation2 + $0x5f0] sm:$0xff]
    %v214 = vld [vmem:[#allocation2 + $0x5f8] sm:$0xff]
    %v215 = vld [vmem:[#allocation2 + $0x600] sm:$0xff]
    %v216 = vld [vmem:[#allocation2 + $0x608] sm:$0xff]
    %v217 = vld [vmem:[#allocation2 + $0x610] sm:$0xff]
    %v218 = vld [vmem:[#allocation2 + $0x618] sm:$0xff]
    %v219 = vld [vmem:[#allocation2 + $0x620] sm:$0xff]
    %v220 = vld [vmem:[#allocation2 + $0x628] sm:$0xff]
    %v221 = vld [vmem:[#allocation2 + $0x630] sm:$0xff]
    %v222 = vld [vmem:[#allocation2 + $0x638] sm:$0xff]
    %v223 = vld [vmem:[#allocation2 + $0x640] sm:$0xff]
    %v224 = vld [vmem:[#allocation2 + $0x648] sm:$0xff]
    %v225 = vld [vmem:[#allocation2 + $0x650] sm:$0xff]
    %v226 = vld [vmem:[#allocation2 + $0x658] sm:$0xff]
    %v227 = vld [vmem:[#allocation2 + $0x660] sm:$0xff]
    %v228 = vld [vmem:[#allocation2 + $0x668] sm:$0xff]
    %v229 = vld [vmem:[#allocation2 + $0x670] sm:$0xff]
    %v230 = vld [vmem:[#allocation2 + $0x678] sm:$0xff]
    %v231 = vld [vmem:[#allocation2 + $0x680] sm:$0xff]
    %v232 = vld [vmem:[#allocation2 + $0x688] sm:$0xff]
    %v233 = vld [vmem:[#allocation2 + $0x690] sm:$0xff]
    %v234 = vld [vmem:[#allocation2 + $0x698] sm:$0xff]
    %v235 = vld [vmem:[#allocation2 + $0x6a0] sm:$0xff]
    %v236 = vld [vmem:[#allocation2 + $0x6a8] sm:$0xff]
    %v237 = vld [vmem:[#allocation2 + $0x6b0] sm:$0xff]
    %v238 = vld [vmem:[#allocation2 + $0x6b8] sm:$0xff]
    %v239 = vld [vmem:[#allocation2 + $0x6c0] sm:$0xff]
    %v240 = vld [vmem:[#allocation2 + $0x6c8] sm:$0xff]
    %v241 = vld [vmem:[#allocation2 + $0x6d0] sm:$0xff]
    %v242 = vld [vmem:[#allocation2 + $0x6d8] sm:$0xff]
    %v243 = vld [vmem:[#allocation2 + $0x6e0] sm:$0xff]
    %v244 = vld [vmem:[#allocation2 + $0x6e8] sm:$0xff]
    %v245 = vld [vmem:[#allocation2 + $0x6f0] sm:$0xff]
    %v246 = vld [vmem:[#allocation2 + $0x6f8] sm:$0xff]
    %v247 = vld [vmem:[#allocation2 + $0x700] sm:$0xff]
    %v248 = vld [vmem:[#allocation2 + $0x708] sm:$0xff]
    %v249 = vld [vmem:[#allocation2 + $0x710] sm:$0xff]
    %v250 = vld [vmem:[#allocation2 + $0x718] sm:$0xff]
    %v251 = vld [vmem:[#allocation2 + $0x720] sm:$0xff]
    %v252 = vld [vmem:[#allocation2 + $0x728] sm:$0xff]
    %v253 = vld [vmem:[#allocation2 + $0x730] sm:$0xff]
    %v254 = vld [vmem:[#allocation2 + $0x738] sm:$0xff]
    %v255 = vld [vmem:[#allocation2 + $0x740] sm:$0xff]
    %v256 = vld [vmem:[#allocation2 + $0x748] sm:$0xff]
    %v257 = vld [vmem:[#allocation2 + $0x750] sm:$0xff]
    %v258 = vld [vmem:[#allocation2 + $0x758] sm:$0xff]
    %v259 = vld [vmem:[#allocation2 + $0x760] sm:$0xff]
    %v260 = vld [vmem:[#allocation2 + $0x768] sm:$0xff]
    %v261 = vld [vmem:[#allocation2 + $0x770] sm:$0xff]
    %v262 = vld [vmem:[#allocation2 + $0x778] sm:$0xff]
    %v263 = vld [vmem:[#allocation2 + $0x780] sm:$0xff]
    %v264 = vld [vmem:[#allocation2 + $0x788] sm:$0xff]
    %v265 = vld [vmem:[#allocation2 + $0x790] sm:$0xff]
    %v266 = vld [vmem:[#allocation2 + $0x798] sm:$0xff]
    %v267 = vld [vmem:[#allocation2 + $0x7a0] sm:$0xff]
    %v268 = vld [vmem:[#allocation2 + $0x7a8] sm:$0xff]
    %v269 = vld [vmem:[#allocation2 + $0x7b0] sm:$0xff]
    %v270 = vld [vmem:[#allocation2 + $0x7b8] sm:$0xff]
    %v271 = vld [vmem:[#allocation2 + $0x7c0] sm:$0xff]
    %v272 = vld [vmem:[#allocation2 + $0x7c8] sm:$0xff]
    %v273 = vld [vmem:[#allocation2 + $0x7d0] sm:$0xff]
    %v274 = vld [vmem:[#allocation2 + $0x7d8] sm:$0xff]
    %v275 = vld [vmem:[#allocation2 + $0x7e0] sm:$0xff]
    %v276 = vld [vmem:[#allocation2 + $0x7e8] sm:$0xff]
    %v277 = vld [vmem:[#allocation2 + $0x7f0] sm:$0xff]
    %v278 = vld [vmem:[#allocation2 + $0x7f8] sm:$0xff]
    %v279 = vld [vmem:[#allocation2 + $0x800] sm:$0xff]
    %v280 = vld [vmem:[#allocation2 + $0x808] sm:$0xff]
    %v281 = vld [vmem:[#allocation2 + $0x810] sm:$0xff]
    %v282 = vld [vmem:[#allocation2 + $0x818] sm:$0xff]
    %v283 = vld [vmem:[#allocation2 + $0x820] sm:$0xff]
    %v284 = vld [vmem:[#allocation2 + $0x828] sm:$0xff]
    %v285 = vld [vmem:[#allocation2 + $0x830] sm:$0xff]
    %v286 = vld [vmem:[#allocation2 + $0x838] sm:$0xff]
    %v287 = vld [vmem:[#allocation2 + $0x840] sm:$0xff]
    %v288 = vld [vmem:[#allocation2 + $0x848] sm:$0xff]
    %v289 = vld [vmem:[#allocation2 + $0x850] sm:$0xff]
    %v290 = vld [vmem:[#allocation2 + $0x858] sm:$0xff]
    %v291 = vld [vmem:[#allocation2 + $0x860] sm:$0xff]
    %v292 = vld [vmem:[#allocation2 + $0x868] sm:$0xff]
    %v293 = vld [vmem:[#allocation2 + $0x870] sm:$0xff]
    %v294 = vld [vmem:[#allocation2 + $0x878] sm:$0xff]
    %v295 = vld [vmem:[#allocation2 + $0x880] sm:$0xff]
    %v296 = vld [vmem:[#allocation2 + $0x888] sm:$0xff]
    %v297 = vld [vmem:[#allocation2 + $0x890] sm:$0xff]
    %v298 = vld [vmem:[#allocation2 + $0x898] sm:$0xff]
    %v299 = vld [vmem:[#allocation2 + $0x8a0] sm:$0xff]
    %v300 = vld [vmem:[#allocation2 + $0x8a8] sm:$0xff]
    %v301 = vld [vmem:[#allocation2 + $0x8b0] sm:$0xff]
    %v302 = vld [vmem:[#allocation2 + $0x8b8] sm:$0xff]
    %v303 = vld [vmem:[#allocation2 + $0x8c0] sm:$0xff]
    %v304 = vld [vmem:[#allocation2 + $0x8c8] sm:$0xff]
    %v305 = vld [vmem:[#allocation2 + $0x8d0] sm:$0xff]
    %v306 = vld [vmem:[#allocation2 + $0x8d8] sm:$0xff]
    %v307 = vld [vmem:[#allocation2 + $0x8e0] sm:$0xff]
    %v308 = vld [vmem:[#allocation2 + $0x8e8] sm:$0xff]
    %v309 = vld [vmem:[#allocation2 + $0x8f0] sm:$0xff]
    %v310 = vld [vmem:[#allocation2 + $0x8f8] sm:$0xff]
    %v311 = vld [vmem:[#allocation2 + $0x900] sm:$0xff]
    %v312 = vld [vmem:[#allocation2 + $0x908] sm:$0xff]
    %v313 = vld [vmem:[#allocation2 + $0x910] sm:$0xff]
    %v314 = vld [vmem:[#allocation2 + $0x918] sm:$0xff]
    %v315 = vld [vmem:[#allocation2 + $0x920] sm:$0xff]
    %v316 = vld [vmem:[#allocation2 + $0x928] sm:$0xff]
    %v317 = vld [vmem:[#allocation2 + $0x930] sm:$0xff]
    %v318 = vld [vmem:[#allocation2 + $0x938] sm:$0xff]
    %v319 = vld [vmem:[#allocation2 + $0x940] sm:$0xff]
    %v320 = vld [vmem:[#allocation2 + $0x948] sm:$0xff]
    %v321 = vld [vmem:[#allocation2 + $0x950] sm:$0xff]
    %v322 = vld [vmem:[#allocation2 + $0x958] sm:$0xff]
    %v323 = vld [vmem:[#allocation2 + $0x960] sm:$0xff]
    %v324 = vld [vmem:[#allocation2 + $0x968] sm:$0xff]
    %v325 = vld [vmem:[#allocation2 + $0x970] sm:$0xff]
    %v326 = vld [vmem:[#allocation2 + $0x978] sm:$0xff]
    %v327 = vld [vmem:[#allocation2 + $0x980] sm:$0xff]
    %v328 = vld [vmem:[#allocation2 + $0x988] sm:$0xff]
    %v329 = vld [vmem:[#allocation2 + $0x990] sm:$0xff]
    %v330 = vld [vmem:[#allocation2 + $0x998] sm:$0xff]
    %v331 = vld [vmem:[#allocation2 + $0x9a0] sm:$0xff]
    %v332 = vld [vmem:[#allocation2 + $0x9a8] sm:$0xff]
    %v333 = vld [vmem:[#allocation2 + $0x9b0] sm:$0xff]
    %v334 = vld [vmem:[#allocation2 + $0x9b8] sm:$0xff]
    %v335 = vld [vmem:[#allocation2 + $0x9c0] sm:$0xff]
    %v336 = vld [vmem:[#allocation2 + $0x9c8] sm:$0xff]
    %v337 = vld [vmem:[#allocation2 + $0x9d0] sm:$0xff]
    %v338 = vld [vmem:[#allocation2 + $0x9d8] sm:$0xff]
    %v339 = vld [vmem:[#allocation2 + $0x9e0] sm:$0xff]
    %v340 = vld [vmem:[#allocation2 + $0x9e8] sm:$0xff]
    %v341 = vld [vmem:[#allocation2 + $0x9f0] sm:$0xff]
    %v342 = vld [vmem:[#allocation2 + $0x9f8] sm:$0xff]
    %v343 = vld [vmem:[#allocation2 + $0xa00] sm:$0xff]
    %v344 = vld [vmem:[#allocation2 + $0xa08] sm:$0xff]
    %v345 = vld [vmem:[#allocation2 + $0xa10] sm:$0xff]
    %v346 = vld [vmem:[#allocation2 + $0xa18] sm:$0xff]
    %v347 = vld [vmem:[#allocation2 + $0xa20] sm:$0xff]
    %v348 = vld [vmem:[#allocation2 + $0xa28] sm:$0xff]
    %v349 = vld [vmem:[#allocation2 + $0xa30] sm:$0xff]
    %v350 = vld [vmem:[#allocation2 + $0xa38] sm:$0xff]
    %v351 = vld [vmem:[#allocation2 + $0xa40] sm:$0xff]
    %v352 = vld [vmem:[#allocation2 + $0xa48] sm:$0xff]
    %v353 = vld [vmem:[#allocation2 + $0xa50] sm:$0xff]
    %v354 = vld [vmem:[#allocation2 + $0xa58] sm:$0xff]
    %v355 = vld [vmem:[#allocation2 + $0xa60] sm:$0xff]
    %v356 = vld [vmem:[#allocation2 + $0xa68] sm:$0xff]
    %v357 = vld [vmem:[#allocation2 + $0xa70] sm:$0xff]
    %v358 = vld [vmem:[#allocation2 + $0xa78] sm:$0xff]
    %v359 = vld [vmem:[#allocation2 + $0xa80] sm:$0xff]
    %v360 = vld [vmem:[#allocation2 + $0xa88] sm:$0xff]
    %v361 = vld [vmem:[#allocation2 + $0xa90] sm:$0xff]
    %v362 = vld [vmem:[#allocation2 + $0xa98] sm:$0xff]
    %v363 = vld [vmem:[#allocation2 + $0xaa0] sm:$0xff]
    %v364 = vld [vmem:[#allocation2 + $0xaa8] sm:$0xff]
    %v365 = vld [vmem:[#allocation2 + $0xab0] sm:$0xff]
    %v366 = vld [vmem:[#allocation2 + $0xab8] sm:$0xff]
    %v367 = vld [vmem:[#allocation2 + $0xac0] sm:$0xff]
    %v368 = vld [vmem:[#allocation2 + $0xac8] sm:$0xff]
    %v369 = vld [vmem:[#allocation2 + $0xad0] sm:$0xff]
    %v370 = vld [vmem:[#allocation2 + $0xad8] sm:$0xff]
    %v371 = vld [vmem:[#allocation2 + $0xae0] sm:$0xff]
    %v372 = vld [vmem:[#allocation2 + $0xae8] sm:$0xff]
    %v373 = vld [vmem:[#allocation2 + $0xaf0] sm:$0xff]
    %v374 = vld [vmem:[#allocation2 + $0xaf8] sm:$0xff]
    %v375 = vld [vmem:[#allocation2 + $0xb00] sm:$0xff]
    %v376 = vld [vmem:[#allocation2 + $0xb08] sm:$0xff]
    %v377 = vld [vmem:[#allocation2 + $0xb10] sm:$0xff]
    %v378 = vld [vmem:[#allocation2 + $0xb18] sm:$0xff]
    %v379 = vld [vmem:[#allocation2 + $0xb20] sm:$0xff]
    %v380 = vld [vmem:[#allocation2 + $0xb28] sm:$0xff]
    %v381 = vld [vmem:[#allocation2 + $0xb30] sm:$0xff]
    %v382 = vld [vmem:[#allocation2 + $0xb38] sm:$0xff]
    %v383 = vld [vmem:[#allocation2 + $0xb40] sm:$0xff]
    %v384 = vld [vmem:[#allocation2 + $0xb48] sm:$0xff]
    %v385 = vld [vmem:[#allocation2 + $0xb50] sm:$0xff]
    %v386 = vld [vmem:[#allocation2 + $0xb58] sm:$0xff]
    %v387 = vld [vmem:[#allocation2 + $0xb60] sm:$0xff]
    %v388 = vld [vmem:[#allocation2 + $0xb68] sm:$0xff]
    %v389 = vld [vmem:[#allocation2 + $0xb70] sm:$0xff]
    %v390 = vld [vmem:[#allocation2 + $0xb78] sm:$0xff]
    %v391 = vld [vmem:[#allocation2 + $0xb80] sm:$0xff]
    %v392 = vld [vmem:[#allocation2 + $0xb88] sm:$0xff]
    %v393 = vld [vmem:[#allocation2 + $0xb90] sm:$0xff]
    %v394 = vld [vmem:[#allocation2 + $0xb98] sm:$0xff]
    %v395 = vld [vmem:[#allocation2 + $0xba0] sm:$0xff]
    %v396 = vld [vmem:[#allocation2 + $0xba8] sm:$0xff]
    %v397 = vld [vmem:[#allocation2 + $0xbb0] sm:$0xff]
    %v398 = vld [vmem:[#allocation2 + $0xbb8] sm:$0xff]
    %v399 = vld [vmem:[#allocation2 + $0xbc0] sm:$0xff]
    %v400 = vld [vmem:[#allocation2 + $0xbc8] sm:$0xff]
    %v401 = vld [vmem:[#allocation2 + $0xbd0] sm:$0xff]
    %v402 = vld [vmem:[#allocation2 + $0xbd8] sm:$0xff]
    %v403 = vld [vmem:[#allocation2 + $0xbe0] sm:$0xff]
    %v404 = vld [vmem:[#allocation2 + $0xbe8] sm:$0xff]
    %v405 = vld [vmem:[#allocation2 + $0xbf0] sm:$0xff]
    %v406 = vld [vmem:[#allocation2 + $0xbf8] sm:$0xff]
    %v407 = vld [vmem:[#allocation2 + $0xc00] sm:$0xff]
    %v408 = vld [vmem:[#allocation2 + $0xc08] sm:$0xff]
    %v409 = vld [vmem:[#allocation2 + $0xc10] sm:$0xff]
    %v410 = vld [vmem:[#allocation2 + $0xc18] sm:$0xff]
    %v411 = vld [vmem:[#allocation2 + $0xc20] sm:$0xff]
    %v412 = vld [vmem:[#allocation2 + $0xc28] sm:$0xff]
    %v413 = vld [vmem:[#allocation2 + $0xc30] sm:$0xff]
    %v414 = vld [vmem:[#allocation2 + $0xc38] sm:$0xff]
    %v415 = vld [vmem:[#allocation2 + $0xc40] sm:$0xff]
    %v416 = vld [vmem:[#allocation2 + $0xc48] sm:$0xff]
    %v417 = vld [vmem:[#allocation2 + $0xc50] sm:$0xff]
    %v418 = vld [vmem:[#allocation2 + $0xc58] sm:$0xff]
    %v419 = vld [vmem:[#allocation2 + $0xc60] sm:$0xff]
    %v420 = vld [vmem:[#allocation2 + $0xc68] sm:$0xff]
    %v421 = vld [vmem:[#allocation2 + $0xc70] sm:$0xff]
    %v422 = vld [vmem:[#allocation2 + $0xc78] sm:$0xff]
    %v423 = vld [vmem:[#allocation2 + $0xc80] sm:$0xff]
    %v424 = vld [vmem:[#allocation2 + $0xc88] sm:$0xff]
    %v425 = vld [vmem:[#allocation2 + $0xc90] sm:$0xff]
    %v426 = vld [vmem:[#allocation2 + $0xc98] sm:$0xff]
    %v427 = vld [vmem:[#allocation2 + $0xca0] sm:$0xff]
    %v428 = vld [vmem:[#allocation2 + $0xca8] sm:$0xff]
    %v429 = vld [vmem:[#allocation2 + $0xcb0] sm:$0xff]
    %v430 = vld [vmem:[#allocation2 + $0xcb8] sm:$0xff]
    %v431 = vld [vmem:[#allocation2 + $0xcc0] sm:$0xff]
    %v432 = vld [vmem:[#allocation2 + $0xcc8] sm:$0xff]
    %v433 = vld [vmem:[#allocation2 + $0xcd0] sm:$0xff]
    %v434 = vld [vmem:[#allocation2 + $0xcd8] sm:$0xff]
    %v435 = vld [vmem:[#allocation2 + $0xce0] sm:$0xff]
    %v436 = vld [vmem:[#allocation2 + $0xce8] sm:$0xff]
    %v437 = vld [vmem:[#allocation2 + $0xcf0] sm:$0xff]
    %v438 = vld [vmem:[#allocation2 + $0xcf8] sm:$0xff]
    %v439 = vld [vmem:[#allocation2 + $0xd00] sm:$0xff]
    %v440 = vld [vmem:[#allocation2 + $0xd08] sm:$0xff]
    %v441 = vld [vmem:[#allocation2 + $0xd10] sm:$0xff]
    %v442 = vld [vmem:[#allocation2 + $0xd18] sm:$0xff]
    %v443 = vld [vmem:[#allocation2 + $0xd20] sm:$0xff]
    %v444 = vld [vmem:[#allocation2 + $0xd28] sm:$0xff]
    %v445 = vld [vmem:[#allocation2 + $0xd30] sm:$0xff]
    %v446 = vld [vmem:[#allocation2 + $0xd38] sm:$0xff]
    %v447 = vld [vmem:[#allocation2 + $0xd40] sm:$0xff]
    %v448 = vld [vmem:[#allocation2 + $0xd48] sm:$0xff]
    %v449 = vld [vmem:[#allocation2 + $0xd50] sm:$0xff]
    %v450 = vld [vmem:[#allocation2 + $0xd58] sm:$0xff]
    %v451 = vld [vmem:[#allocation2 + $0xd60] sm:$0xff]
    %v452 = vld [vmem:[#allocation2 + $0xd68] sm:$0xff]
    %v453 = vld [vmem:[#allocation2 + $0xd70] sm:$0xff]
    %v454 = vld [vmem:[#allocation2 + $0xd78] sm:$0xff]
    %v455 = vld [vmem:[#allocation2 + $0xd80] sm:$0xff]
    %v456 = vld [vmem:[#allocation2 + $0xd88] sm:$0xff]
    %v457 = vld [vmem:[#allocation2 + $0xd90] sm:$0xff]
    %v458 = vld [vmem:[#allocation2 + $0xd98] sm:$0xff]
    %v459 = vld [vmem:[#allocation2 + $0xda0] sm:$0xff]
    %v460 = vld [vmem:[#allocation2 + $0xda8] sm:$0xff]
    %v461 = vld [vmem:[#allocation2 + $0xdb0] sm:$0xff]
    %v462 = vld [vmem:[#allocation2 + $0xdb8] sm:$0xff]
    %v463 = vld [vmem:[#allocation2 + $0xdc0] sm:$0xff]
    %v464 = vld [vmem:[#allocation2 + $0xdc8] sm:$0xff]
    %v465 = vld [vmem:[#allocation2 + $0xdd0] sm:$0xff]
    %v466 = vld [vmem:[#allocation2 + $0xdd8] sm:$0xff]
    %v467 = vld [vmem:[#allocation2 + $0xde0] sm:$0xff]
    %v468 = vld [vmem:[#allocation2 + $0xde8] sm:$0xff]
    %v469 = vld [vmem:[#allocation2 + $0xdf0] sm:$0xff]
    %v470 = vld [vmem:[#allocation2 + $0xdf8] sm:$0xff]
    %v471 = vld [vmem:[#allocation2 + $0xe00] sm:$0xff]
    %v472 = vld [vmem:[#allocation2 + $0xe08] sm:$0xff]
    %v473 = vld [vmem:[#allocation2 + $0xe10] sm:$0xff]
    %v474 = vld [vmem:[#allocation2 + $0xe18] sm:$0xff]
    %v475 = vld [vmem:[#allocation2 + $0xe20] sm:$0xff]
    %v476 = vld [vmem:[#allocation2 + $0xe28] sm:$0xff]
    %v477 = vld [vmem:[#allocation2 + $0xe30] sm:$0xff]
    %v478 = vld [vmem:[#allocation2 + $0xe38] sm:$0xff]
    %v479 = vld [vmem:[#allocation2 + $0xe40] sm:$0xff]
    %v480 = vld [vmem:[#allocation2 + $0xe48] sm:$0xff]
    %v481 = vld [vmem:[#allocation2 + $0xe50] sm:$0xff]
    %v482 = vld [vmem:[#allocation2 + $0xe58] sm:$0xff]
    %v483 = vld [vmem:[#allocation2 + $0xe60] sm:$0xff]
    %v484 = vld [vmem:[#allocation2 + $0xe68] sm:$0xff]
    %v485 = vld [vmem:[#allocation2 + $0xe70] sm:$0xff]
    %v486 = vld [vmem:[#allocation2 + $0xe78] sm:$0xff]
    %v487 = vld [vmem:[#allocation2 + $0xe80] sm:$0xff]
    %v488 = vld [vmem:[#allocation2 + $0xe88] sm:$0xff]
    %v489 = vld [vmem:[#allocation2 + $0xe90] sm:$0xff]
    %v490 = vld [vmem:[#allocation2 + $0xe98] sm:$0xff]
    %v491 = vld [vmem:[#allocation2 + $0xea0] sm:$0xff]
    %v492 = vld [vmem:[#allocation2 + $0xea8] sm:$0xff]
    %v493 = vld [vmem:[#allocation2 + $0xeb0] sm:$0xff]
    %v494 = vld [vmem:[#allocation2 + $0xeb8] sm:$0xff]
    %v495 = vld [vmem:[#allocation2 + $0xec0] sm:$0xff]
    %v496 = vld [vmem:[#allocation2 + $0xec8] sm:$0xff]
    %v497 = vld [vmem:[#allocation2 + $0xed0] sm:$0xff]
    %v498 = vld [vmem:[#allocation2 + $0xed8] sm:$0xff]
    %v499 = vld [vmem:[#allocation2 + $0xee0] sm:$0xff]
    %v500 = vld [vmem:[#allocation2 + $0xee8] sm:$0xff]
    %v501 = vld [vmem:[#allocation2 + $0xef0] sm:$0xff]
    %v502 = vld [vmem:[#allocation2 + $0xef8] sm:$0xff]
    %v503 = vld [vmem:[#allocation2 + $0xf00] sm:$0xff]
    %v504 = vld [vmem:[#allocation2 + $0xf08] sm:$0xff]
    %v505 = vld [vmem:[#allocation2 + $0xf10] sm:$0xff]
    %v506 = vld [vmem:[#allocation2 + $0xf18] sm:$0xff]
    %v507 = vld [vmem:[#allocation2 + $0xf20] sm:$0xff]
    %v508 = vld [vmem:[#allocation2 + $0xf28] sm:$0xff]
    %v509 = vld [vmem:[#allocation2 + $0xf30] sm:$0xff]
    %v510 = vld [vmem:[#allocation2 + $0xf38] sm:$0xff]
    %v511 = vld [vmem:[#allocation2 + $0xf40] sm:$0xff]
    %v512 = vld [vmem:[#allocation2 + $0xf48] sm:$0xff]
    %v513 = vld [vmem:[#allocation2 + $0xf50] sm:$0xff]
    %v514 = vld [vmem:[#allocation2 + $0xf58] sm:$0xff]
    %v515 = vld [vmem:[#allocation2 + $0xf60] sm:$0xff]
    %v516 = vld [vmem:[#allocation2 + $0xf68] sm:$0xff]
    %v517 = vld [vmem:[#allocation2 + $0xf70] sm:$0xff]
    %v518 = vld [vmem:[#allocation2 + $0xf78] sm:$0xff]
    %v519 = vld [vmem:[#allocation2 + $0xf80] sm:$0xff]
    %v520 = vld [vmem:[#allocation2 + $0xf88] sm:$0xff]
    %v521 = vld [vmem:[#allocation2 + $0xf90] sm:$0xff]
    %v522 = vld [vmem:[#allocation2 + $0xf98] sm:$0xff]
    %v523 = vld [vmem:[#allocation2 + $0xfa0] sm:$0xff]
    %v524 = vld [vmem:[#allocation2 + $0xfa8] sm:$0xff]
    %v525 = vld [vmem:[#allocation2 + $0xfb0] sm:$0xff]
    %v526 = vld [vmem:[#allocation2 + $0xfb8] sm:$0xff]
    %v527 = vld [vmem:[#allocation2 + $0xfc0] sm:$0xff]
    %v528 = vld [vmem:[#allocation2 + $0xfc8] sm:$0xff]
    %v529 = vld [vmem:[#allocation2 + $0xfd0] sm:$0xff]
    %v530 = vld [vmem:[#allocation2 + $0xfd8] sm:$0xff]
    %v531 = vld [vmem:[#allocation2 + $0xfe0] sm:$0xff]
    %v532 = vld [vmem:[#allocation2 + $0xfe8] sm:$0xff]
    %v533 = vld [vmem:[#allocation2 + $0xff0] sm:$0xff]
    %v534 = vld [vmem:[#allocation2 + $0xff8] sm:$0xff]
    %535 = vxpose.xlu0.b32.start [1/16] %v23, 128
    %536 = vxpose.xlu0.b32.cont [2/16] %v27, 128
    %537 = vxpose.xlu0.b32.cont [3/16] %v31, 128
    %538 = vxpose.xlu0.b32.cont [4/16] %v35, 128
    %539 = vxpose.xlu0.b32.cont [5/16] %v39, 128
    %540 = vxpose.xlu0.b32.cont [6/16] %v43, 128
    %541 = vxpose.xlu0.b32.cont [7/16] %v47, 128
    %542 = vxpose.xlu0.b32.cont [8/16] %v51, 128
    %543 = vxpose.xlu0.b32.cont [9/16] %v55, 128
    %544 = vxpose.xlu0.b32.cont [10/16] %v59, 128
    %545 = vxpose.xlu0.b32.cont [11/16] %v63, 128
    %546 = vxpose.xlu0.b32.cont [12/16] %v67, 128
    %547 = vxpose.xlu0.b32.cont [13/16] %v71, 128
    %548 = vxpose.xlu0.b32.cont [14/16] %v75, 128
    %549 = vxpose.xlu0.b32.cont [15/16] %v79, 128
    %550 = vxpose.xlu0.b32.end [16/16] %v83, 128
    %v551 = vpop.trf.xlu0
    %v552 = vpop.trf.xlu0
    %v553 = vpop.trf.xlu0
    %v554 = vpop.trf.xlu0
    %v555 = vpop.trf.xlu0
    %v556 = vpop.trf.xlu0
    %v557 = vpop.trf.xlu0
    %v558 = vpop.trf.xlu0
    %v559 = vpop.trf.xlu0
    %v560 = vpop.trf.xlu0
    %v561 = vpop.trf.xlu0
    %v562 = vpop.trf.xlu0
    %v563 = vpop.trf.xlu0
    %v564 = vpop.trf.xlu0
    %v565 = vpop.trf.xlu0
    %v566 = vpop.trf.xlu0
    %567 = vxpose.xlu0.b32.start [1/16] %v24, 128
    %568 = vxpose.xlu0.b32.cont [2/16] %v28, 128
    %569 = vxpose.xlu0.b32.cont [3/16] %v32, 128
    %570 = vxpose.xlu0.b32.cont [4/16] %v36, 128
    %571 = vxpose.xlu0.b32.cont [5/16] %v40, 128
    %572 = vxpose.xlu0.b32.cont [6/16] %v44, 128
    %573 = vxpose.xlu0.b32.cont [7/16] %v48, 128
    %574 = vxpose.xlu0.b32.cont [8/16] %v52, 128
    %575 = vxpose.xlu0.b32.cont [9/16] %v56, 128
    %576 = vxpose.xlu0.b32.cont [10/16] %v60, 128
    %577 = vxpose.xlu0.b32.cont [11/16] %v64, 128
    %578 = vxpose.xlu0.b32.cont [12/16] %v68, 128
    %579 = vxpose.xlu0.b32.cont [13/16] %v72, 128
    %580 = vxpose.xlu0.b32.cont [14/16] %v76, 128
    %581 = vxpose.xlu0.b32.cont [15/16] %v80, 128
    %582 = vxpose.xlu0.b32.end [16/16] %v84, 128
    %v583 = vpop.trf.xlu0
    %v584 = vpop.trf.xlu0
    %v585 = vpop.trf.xlu0
    %v586 = vpop.trf.xlu0
    %v587 = vpop.trf.xlu0
    %v588 = vpop.trf.xlu0
    %v589 = vpop.trf.xlu0
    %v590 = vpop.trf.xlu0
    %v591 = vpop.trf.xlu0
    %v592 = vpop.trf.xlu0
    %v593 = vpop.trf.xlu0
    %v594 = vpop.trf.xlu0
    %v595 = vpop.trf.xlu0
    %v596 = vpop.trf.xlu0
    %v597 = vpop.trf.xlu0
    %v598 = vpop.trf.xlu0
    %599 = vxpose.xlu0.b32.start [1/16] %v25, 128
    %600 = vxpose.xlu0.b32.cont [2/16] %v29, 128
    %601 = vxpose.xlu0.b32.cont [3/16] %v33, 128
    %602 = vxpose.xlu0.b32.cont [4/16] %v37, 128
    %603 = vxpose.xlu0.b32.cont [5/16] %v41, 128
    %604 = vxpose.xlu0.b32.cont [6/16] %v45, 128
    %605 = vxpose.xlu0.b32.cont [7/16] %v49, 128
    %606 = vxpose.xlu0.b32.cont [8/16] %v53, 128
    %607 = vxpose.xlu0.b32.cont [9/16] %v57, 128
    %608 = vxpose.xlu0.b32.cont [10/16] %v61, 128
    %609 = vxpose.xlu0.b32.cont [11/16] %v65, 128
    %610 = vxpose.xlu0.b32.cont [12/16] %v69, 128
    %611 = vxpose.xlu0.b32.cont [13/16] %v73, 128
    %612 = vxpose.xlu0.b32.cont [14/16] %v77, 128
    %613 = vxpose.xlu0.b32.cont [15/16] %v81, 128
    %614 = vxpose.xlu0.b32.end [16/16] %v85, 128
    %v615 = vpop.trf.xlu0
    %v616 = vpop.trf.xlu0
    %v617 = vpop.trf.xlu0
    %v618 = vpop.trf.xlu0
    %v619 = vpop.trf.xlu0
    %v620 = vpop.trf.xlu0
    %v621 = vpop.trf.xlu0
    %v622 = vpop.trf.xlu0
    %v623 = vpop.trf.xlu0
    %v624 = vpop.trf.xlu0
    %v625 = vpop.trf.xlu0
    %v626 = vpop.trf.xlu0
    %v627 = vpop.trf.xlu0
    %v628 = vpop.trf.xlu0
    %v629 = vpop.trf.xlu0
    %v630 = vpop.trf.xlu0
    %631 = vxpose.xlu0.b32.start [1/16] %v26, 128
    %632 = vxpose.xlu0.b32.cont [2/16] %v30, 128
    %633 = vxpose.xlu0.b32.cont [3/16] %v34, 128
    %634 = vxpose.xlu0.b32.cont [4/16] %v38, 128
    %635 = vxpose.xlu0.b32.cont [5/16] %v42, 128
    %636 = vxpose.xlu0.b32.cont [6/16] %v46, 128
    %637 = vxpose.xlu0.b32.cont [7/16] %v50, 128
    %638 = vxpose.xlu0.b32.cont [8/16] %v54, 128
    %639 = vxpose.xlu0.b32.cont [9/16] %v58, 128
    %640 = vxpose.xlu0.b32.cont [10/16] %v62, 128
    %641 = vxpose.xlu0.b32.cont [11/16] %v66, 128
    %642 = vxpose.xlu0.b32.cont [12/16] %v70, 128
    %643 = vxpose.xlu0.b32.cont [13/16] %v74, 128
    %644 = vxpose.xlu0.b32.cont [14/16] %v78, 128
    %645 = vxpose.xlu0.b32.cont [15/16] %v82, 128
    %646 = vxpose.xlu0.b32.end [16/16] %v86, 128
    %v647 = vpop.trf.xlu0
    %v648 = vpop.trf.xlu0
    %v649 = vpop.trf.xlu0
    %v650 = vpop.trf.xlu0
    %v651 = vpop.trf.xlu0
    %v652 = vpop.trf.xlu0
    %v653 = vpop.trf.xlu0
    %v654 = vpop.trf.xlu0
    %v655 = vpop.trf.xlu0
    %v656 = vpop.trf.xlu0
    %v657 = vpop.trf.xlu0
    %v658 = vpop.trf.xlu0
    %v659 = vpop.trf.xlu0
    %v660 = vpop.trf.xlu0
    %v661 = vpop.trf.xlu0
    %v662 = vpop.trf.xlu0
    %663 = vxpose.xlu0.b32.start [1/16] %v87, 128
    %664 = vxpose.xlu0.b32.cont [2/16] %v91, 128
    %665 = vxpose.xlu0.b32.cont [3/16] %v95, 128
    %666 = vxpose.xlu0.b32.cont [4/16] %v99, 128
    %667 = vxpose.xlu0.b32.cont [5/16] %v103, 128
    %668 = vxpose.xlu0.b32.cont [6/16] %v107, 128
    %669 = vxpose.xlu0.b32.cont [7/16] %v111, 128
    %670 = vxpose.xlu0.b32.cont [8/16] %v115, 128
    %671 = vxpose.xlu0.b32.cont [9/16] %v119, 128
    %672 = vxpose.xlu0.b32.cont [10/16] %v123, 128
    %673 = vxpose.xlu0.b32.cont [11/16] %v127, 128
    %674 = vxpose.xlu0.b32.cont [12/16] %v131, 128
    %675 = vxpose.xlu0.b32.cont [13/16] %v135, 128
    %676 = vxpose.xlu0.b32.cont [14/16] %v139, 128
    %677 = vxpose.xlu0.b32.cont [15/16] %v143, 128
    %678 = vxpose.xlu0.b32.end [16/16] %v147, 128
    %v679 = vpop.trf.xlu0
    %v680 = vpop.trf.xlu0
    %v681 = vpop.trf.xlu0
    %v682 = vpop.trf.xlu0
    %v683 = vpop.trf.xlu0
    %v684 = vpop.trf.xlu0
    %v685 = vpop.trf.xlu0
    %v686 = vpop.trf.xlu0
    %v687 = vpop.trf.xlu0
    %v688 = vpop.trf.xlu0
    %v689 = vpop.trf.xlu0
    %v690 = vpop.trf.xlu0
    %v691 = vpop.trf.xlu0
    %v692 = vpop.trf.xlu0
    %v693 = vpop.trf.xlu0
    %v694 = vpop.trf.xlu0
    %695 = vxpose.xlu0.b32.start [1/16] %v88, 128
    %696 = vxpose.xlu0.b32.cont [2/16] %v92, 128
    %697 = vxpose.xlu0.b32.cont [3/16] %v96, 128
    %698 = vxpose.xlu0.b32.cont [4/16] %v100, 128
    %699 = vxpose.xlu0.b32.cont [5/16] %v104, 128
    %700 = vxpose.xlu0.b32.cont [6/16] %v108, 128
    %701 = vxpose.xlu0.b32.cont [7/16] %v112, 128
    %702 = vxpose.xlu0.b32.cont [8/16] %v116, 128
    %703 = vxpose.xlu0.b32.cont [9/16] %v120, 128
    %704 = vxpose.xlu0.b32.cont [10/16] %v124, 128
    %705 = vxpose.xlu0.b32.cont [11/16] %v128, 128
    %706 = vxpose.xlu0.b32.cont [12/16] %v132, 128
    %707 = vxpose.xlu0.b32.cont [13/16] %v136, 128
    %708 = vxpose.xlu0.b32.cont [14/16] %v140, 128
    %709 = vxpose.xlu0.b32.cont [15/16] %v144, 128
    %710 = vxpose.xlu0.b32.end [16/16] %v148, 128
    %v711 = vpop.trf.xlu0
    %v712 = vpop.trf.xlu0
    %v713 = vpop.trf.xlu0
    %v714 = vpop.trf.xlu0
    %v715 = vpop.trf.xlu0
    %v716 = vpop.trf.xlu0
    %v717 = vpop.trf.xlu0
    %v718 = vpop.trf.xlu0
    %v719 = vpop.trf.xlu0
    %v720 = vpop.trf.xlu0
    %v721 = vpop.trf.xlu0
    %v722 = vpop.trf.xlu0
    %v723 = vpop.trf.xlu0
    %v724 = vpop.trf.xlu0
    %v725 = vpop.trf.xlu0
    %v726 = vpop.trf.xlu0
    %727 = vxpose.xlu0.b32.start [1/16] %v89, 128
    %728 = vxpose.xlu0.b32.cont [2/16] %v93, 128
    %729 = vxpose.xlu0.b32.cont [3/16] %v97, 128
    %730 = vxpose.xlu0.b32.cont [4/16] %v101, 128
    %731 = vxpose.xlu0.b32.cont [5/16] %v105, 128
    %732 = vxpose.xlu0.b32.cont [6/16] %v109, 128
    %733 = vxpose.xlu0.b32.cont [7/16] %v113, 128
    %734 = vxpose.xlu0.b32.cont [8/16] %v117, 128
    %735 = vxpose.xlu0.b32.cont [9/16] %v121, 128
    %736 = vxpose.xlu0.b32.cont [10/16] %v125, 128
    %737 = vxpose.xlu0.b32.cont [11/16] %v129, 128
    %738 = vxpose.xlu0.b32.cont [12/16] %v133, 128
    %739 = vxpose.xlu0.b32.cont [13/16] %v137, 128
    %740 = vxpose.xlu0.b32.cont [14/16] %v141, 128
    %741 = vxpose.xlu0.b32.cont [15/16] %v145, 128
    %742 = vxpose.xlu0.b32.end [16/16] %v149, 128
    %v743 = vpop.trf.xlu0
    %v744 = vpop.trf.xlu0
    %v745 = vpop.trf.xlu0
    %v746 = vpop.trf.xlu0
    %v747 = vpop.trf.xlu0
    %v748 = vpop.trf.xlu0
    %v749 = vpop.trf.xlu0
    %v750 = vpop.trf.xlu0
    %v751 = vpop.trf.xlu0
    %v752 = vpop.trf.xlu0
    %v753 = vpop.trf.xlu0
    %v754 = vpop.trf.xlu0
    %v755 = vpop.trf.xlu0
    %v756 = vpop.trf.xlu0
    %v757 = vpop.trf.xlu0
    %v758 = vpop.trf.xlu0
    %759 = vxpose.xlu0.b32.start [1/16] %v90, 128
    %760 = vxpose.xlu0.b32.cont [2/16] %v94, 128
    %761 = vxpose.xlu0.b32.cont [3/16] %v98, 128
    %762 = vxpose.xlu0.b32.cont [4/16] %v102, 128
    %763 = vxpose.xlu0.b32.cont [5/16] %v106, 128
    %764 = vxpose.xlu0.b32.cont [6/16] %v110, 128
    %765 = vxpose.xlu0.b32.cont [7/16] %v114, 128
    %766 = vxpose.xlu0.b32.cont [8/16] %v118, 128
    %767 = vxpose.xlu0.b32.cont [9/16] %v122, 128
    %768 = vxpose.xlu0.b32.cont [10/16] %v126, 128
    %769 = vxpose.xlu0.b32.cont [11/16] %v130, 128
    %770 = vxpose.xlu0.b32.cont [12/16] %v134, 128
    %771 = vxpose.xlu0.b32.cont [13/16] %v138, 128
    %772 = vxpose.xlu0.b32.cont [14/16] %v142, 128
    %773 = vxpose.xlu0.b32.cont [15/16] %v146, 128
    %774 = vxpose.xlu0.b32.end [16/16] %v150, 128
    %v775 = vpop.trf.xlu0
    %v776 = vpop.trf.xlu0
    %v777 = vpop.trf.xlu0
    %v778 = vpop.trf.xlu0
    %v779 = vpop.trf.xlu0
    %v780 = vpop.trf.xlu0
    %v781 = vpop.trf.xlu0
    %v782 = vpop.trf.xlu0
    %v783 = vpop.trf.xlu0
    %v784 = vpop.trf.xlu0
    %v785 = vpop.trf.xlu0
    %v786 = vpop.trf.xlu0
    %v787 = vpop.trf.xlu0
    %v788 = vpop.trf.xlu0
    %v789 = vpop.trf.xlu0
    %v790 = vpop.trf.xlu0
    %791 = vxpose.xlu0.b32.start [1/16] %v151, 128
    %792 = vxpose.xlu0.b32.cont [2/16] %v155, 128
    %793 = vxpose.xlu0.b32.cont [3/16] %v159, 128
    %794 = vxpose.xlu0.b32.cont [4/16] %v163, 128
    %795 = vxpose.xlu0.b32.cont [5/16] %v167, 128
    %796 = vxpose.xlu0.b32.cont [6/16] %v171, 128
    %797 = vxpose.xlu0.b32.cont [7/16] %v175, 128
    %798 = vxpose.xlu0.b32.cont [8/16] %v179, 128
    %799 = vxpose.xlu0.b32.cont [9/16] %v183, 128
    %800 = vxpose.xlu0.b32.cont [10/16] %v187, 128
    %801 = vxpose.xlu0.b32.cont [11/16] %v191, 128
    %802 = vxpose.xlu0.b32.cont [12/16] %v195, 128
    %803 = vxpose.xlu0.b32.cont [13/16] %v199, 128
    %804 = vxpose.xlu0.b32.cont [14/16] %v203, 128
    %805 = vxpose.xlu0.b32.cont [15/16] %v207, 128
    %806 = vxpose.xlu0.b32.end [16/16] %v211, 128
    %v807 = vpop.trf.xlu0
    %v808 = vpop.trf.xlu0
    %v809 = vpop.trf.xlu0
    %v810 = vpop.trf.xlu0
    %v811 = vpop.trf.xlu0
    %v812 = vpop.trf.xlu0
    %v813 = vpop.trf.xlu0
    %v814 = vpop.trf.xlu0
    %v815 = vpop.trf.xlu0
    %v816 = vpop.trf.xlu0
    %v817 = vpop.trf.xlu0
    %v818 = vpop.trf.xlu0
    %v819 = vpop.trf.xlu0
    %v820 = vpop.trf.xlu0
    %v821 = vpop.trf.xlu0
    %v822 = vpop.trf.xlu0
    %823 = vxpose.xlu0.b32.start [1/16] %v152, 128
    %824 = vxpose.xlu0.b32.cont [2/16] %v156, 128
    %825 = vxpose.xlu0.b32.cont [3/16] %v160, 128
    %826 = vxpose.xlu0.b32.cont [4/16] %v164, 128
    %827 = vxpose.xlu0.b32.cont [5/16] %v168, 128
    %828 = vxpose.xlu0.b32.cont [6/16] %v172, 128
    %829 = vxpose.xlu0.b32.cont [7/16] %v176, 128
    %830 = vxpose.xlu0.b32.cont [8/16] %v180, 128
    %831 = vxpose.xlu0.b32.cont [9/16] %v184, 128
    %832 = vxpose.xlu0.b32.cont [10/16] %v188, 128
    %833 = vxpose.xlu0.b32.cont [11/16] %v192, 128
    %834 = vxpose.xlu0.b32.cont [12/16] %v196, 128
    %835 = vxpose.xlu0.b32.cont [13/16] %v200, 128
    %836 = vxpose.xlu0.b32.cont [14/16] %v204, 128
    %837 = vxpose.xlu0.b32.cont [15/16] %v208, 128
    %838 = vxpose.xlu0.b32.end [16/16] %v212, 128
    %v839 = vpop.trf.xlu0
    %v840 = vpop.trf.xlu0
    %v841 = vpop.trf.xlu0
    %v842 = vpop.trf.xlu0
    %v843 = vpop.trf.xlu0
    %v844 = vpop.trf.xlu0
    %v845 = vpop.trf.xlu0
    %v846 = vpop.trf.xlu0
    %v847 = vpop.trf.xlu0
    %v848 = vpop.trf.xlu0
    %v849 = vpop.trf.xlu0
    %v850 = vpop.trf.xlu0
    %v851 = vpop.trf.xlu0
    %v852 = vpop.trf.xlu0
    %v853 = vpop.trf.xlu0
    %v854 = vpop.trf.xlu0
    %855 = vxpose.xlu0.b32.start [1/16] %v153, 128
    %856 = vxpose.xlu0.b32.cont [2/16] %v157, 128
    %857 = vxpose.xlu0.b32.cont [3/16] %v161, 128
    %858 = vxpose.xlu0.b32.cont [4/16] %v165, 128
    %859 = vxpose.xlu0.b32.cont [5/16] %v169, 128
    %860 = vxpose.xlu0.b32.cont [6/16] %v173, 128
    %861 = vxpose.xlu0.b32.cont [7/16] %v177, 128
    %862 = vxpose.xlu0.b32.cont [8/16] %v181, 128
    %863 = vxpose.xlu0.b32.cont [9/16] %v185, 128
    %864 = vxpose.xlu0.b32.cont [10/16] %v189, 128
    %865 = vxpose.xlu0.b32.cont [11/16] %v193, 128
    %866 = vxpose.xlu0.b32.cont [12/16] %v197, 128
    %867 = vxpose.xlu0.b32.cont [13/16] %v201, 128
    %868 = vxpose.xlu0.b32.cont [14/16] %v205, 128
    %869 = vxpose.xlu0.b32.cont [15/16] %v209, 128
    %870 = vxpose.xlu0.b32.end [16/16] %v213, 128
    %v871 = vpop.trf.xlu0
    %v872 = vpop.trf.xlu0
    %v873 = vpop.trf.xlu0
    %v874 = vpop.trf.xlu0
    %v875 = vpop.trf.xlu0
    %v876 = vpop.trf.xlu0
    %v877 = vpop.trf.xlu0
    %v878 = vpop.trf.xlu0
    %v879 = vpop.trf.xlu0
    %v880 = vpop.trf.xlu0
    %v881 = vpop.trf.xlu0
    %v882 = vpop.trf.xlu0
    %v883 = vpop.trf.xlu0
    %v884 = vpop.trf.xlu0
    %v885 = vpop.trf.xlu0
    %v886 = vpop.trf.xlu0
    %887 = vxpose.xlu0.b32.start [1/16] %v154, 128
    %888 = vxpose.xlu0.b32.cont [2/16] %v158, 128
    %889 = vxpose.xlu0.b32.cont [3/16] %v162, 128
    %890 = vxpose.xlu0.b32.cont [4/16] %v166, 128
    %891 = vxpose.xlu0.b32.cont [5/16] %v170, 128
    %892 = vxpose.xlu0.b32.cont [6/16] %v174, 128
    %893 = vxpose.xlu0.b32.cont [7/16] %v178, 128
    %894 = vxpose.xlu0.b32.cont [8/16] %v182, 128
    %895 = vxpose.xlu0.b32.cont [9/16] %v186, 128
    %896 = vxpose.xlu0.b32.cont [10/16] %v190, 128
    %897 = vxpose.xlu0.b32.cont [11/16] %v194, 128
    %898 = vxpose.xlu0.b32.cont [12/16] %v198, 128
    %899 = vxpose.xlu0.b32.cont [13/16] %v202, 128
    %900 = vxpose.xlu0.b32.cont [14/16] %v206, 128
    %901 = vxpose.xlu0.b32.cont [15/16] %v210, 128
    %902 = vxpose.xlu0.b32.end [16/16] %v214, 128
    %v903 = vpop.trf.xlu0
    %v904 = vpop.trf.xlu0
    %v905 = vpop.trf.xlu0
    %v906 = vpop.trf.xlu0
    %v907 = vpop.trf.xlu0
    %v908 = vpop.trf.xlu0
    %v909 = vpop.trf.xlu0
    %v910 = vpop.trf.xlu0
    %v911 = vpop.trf.xlu0
    %v912 = vpop.trf.xlu0
    %v913 = vpop.trf.xlu0
    %v914 = vpop.trf.xlu0
    %v915 = vpop.trf.xlu0
    %v916 = vpop.trf.xlu0
    %v917 = vpop.trf.xlu0
    %v918 = vpop.trf.xlu0
    %919 = vxpose.xlu0.b32.start [1/16] %v215, 128
    %920 = vxpose.xlu0.b32.cont [2/16] %v219, 128
    %921 = vxpose.xlu0.b32.cont [3/16] %v223, 128
    %922 = vxpose.xlu0.b32.cont [4/16] %v227, 128
    %923 = vxpose.xlu0.b32.cont [5/16] %v231, 128
    %924 = vxpose.xlu0.b32.cont [6/16] %v235, 128
    %925 = vxpose.xlu0.b32.cont [7/16] %v239, 128
    %926 = vxpose.xlu0.b32.cont [8/16] %v243, 128
    %927 = vxpose.xlu0.b32.cont [9/16] %v247, 128
    %928 = vxpose.xlu0.b32.cont [10/16] %v251, 128
    %929 = vxpose.xlu0.b32.cont [11/16] %v255, 128
    %930 = vxpose.xlu0.b32.cont [12/16] %v259, 128
    %931 = vxpose.xlu0.b32.cont [13/16] %v263, 128
    %932 = vxpose.xlu0.b32.cont [14/16] %v267, 128
    %933 = vxpose.xlu0.b32.cont [15/16] %v271, 128
    %934 = vxpose.xlu0.b32.end [16/16] %v275, 128
    %v935 = vpop.trf.xlu0
    %v936 = vpop.trf.xlu0
    %v937 = vpop.trf.xlu0
    %v938 = vpop.trf.xlu0
    %v939 = vpop.trf.xlu0
    %v940 = vpop.trf.xlu0
    %v941 = vpop.trf.xlu0
    %v942 = vpop.trf.xlu0
    %v943 = vpop.trf.xlu0
    %v944 = vpop.trf.xlu0
    %v945 = vpop.trf.xlu0
    %v946 = vpop.trf.xlu0
    %v947 = vpop.trf.xlu0
    %v948 = vpop.trf.xlu0
    %v949 = vpop.trf.xlu0
    %v950 = vpop.trf.xlu0
    %951 = vxpose.xlu0.b32.start [1/16] %v216, 128
    %952 = vxpose.xlu0.b32.cont [2/16] %v220, 128
    %953 = vxpose.xlu0.b32.cont [3/16] %v224, 128
    %954 = vxpose.xlu0.b32.cont [4/16] %v228, 128
    %955 = vxpose.xlu0.b32.cont [5/16] %v232, 128
    %956 = vxpose.xlu0.b32.cont [6/16] %v236, 128
    %957 = vxpose.xlu0.b32.cont [7/16] %v240, 128
    %958 = vxpose.xlu0.b32.cont [8/16] %v244, 128
    %959 = vxpose.xlu0.b32.cont [9/16] %v248, 128
    %960 = vxpose.xlu0.b32.cont [10/16] %v252, 128
    %961 = vxpose.xlu0.b32.cont [11/16] %v256, 128
    %962 = vxpose.xlu0.b32.cont [12/16] %v260, 128
    %963 = vxpose.xlu0.b32.cont [13/16] %v264, 128
    %964 = vxpose.xlu0.b32.cont [14/16] %v268, 128
    %965 = vxpose.xlu0.b32.cont [15/16] %v272, 128
    %966 = vxpose.xlu0.b32.end [16/16] %v276, 128
    %v967 = vpop.trf.xlu0
    %v968 = vpop.trf.xlu0
    %v969 = vpop.trf.xlu0
    %v970 = vpop.trf.xlu0
    %v971 = vpop.trf.xlu0
    %v972 = vpop.trf.xlu0
    %v973 = vpop.trf.xlu0
    %v974 = vpop.trf.xlu0
    %v975 = vpop.trf.xlu0
    %v976 = vpop.trf.xlu0
    %v977 = vpop.trf.xlu0
    %v978 = vpop.trf.xlu0
    %v979 = vpop.trf.xlu0
    %v980 = vpop.trf.xlu0
    %v981 = vpop.trf.xlu0
    %v982 = vpop.trf.xlu0
    %983 = vxpose.xlu0.b32.start [1/16] %v217, 128
    %984 = vxpose.xlu0.b32.cont [2/16] %v221, 128
    %985 = vxpose.xlu0.b32.cont [3/16] %v225, 128
    %986 = vxpose.xlu0.b32.cont [4/16] %v229, 128
    %987 = vxpose.xlu0.b32.cont [5/16] %v233, 128
    %988 = vxpose.xlu0.b32.cont [6/16] %v237, 128
    %989 = vxpose.xlu0.b32.cont [7/16] %v241, 128
    %990 = vxpose.xlu0.b32.cont [8/16] %v245, 128
    %991 = vxpose.xlu0.b32.cont [9/16] %v249, 128
    %992 = vxpose.xlu0.b32.cont [10/16] %v253, 128
    %993 = vxpose.xlu0.b32.cont [11/16] %v257, 128
    %994 = vxpose.xlu0.b32.cont [12/16] %v261, 128
    %995 = vxpose.xlu0.b32.cont [13/16] %v265, 128
    %996 = vxpose.xlu0.b32.cont [14/16] %v269, 128
    %997 = vxpose.xlu0.b32.cont [15/16] %v273, 128
    %998 = vxpose.xlu0.b32.end [16/16] %v277, 128
    %v999 = vpop.trf.xlu0
    %v1000 = vpop.trf.xlu0
    %v1001 = vpop.trf.xlu0
    %v1002 = vpop.trf.xlu0
    %v1003 = vpop.trf.xlu0
    %v1004 = vpop.trf.xlu0
    %v1005 = vpop.trf.xlu0
    %v1006 = vpop.trf.xlu0
    %v1007 = vpop.trf.xlu0
    %v1008 = vpop.trf.xlu0
    %v1009 = vpop.trf.xlu0
    %v1010 = vpop.trf.xlu0
    %v1011 = vpop.trf.xlu0
    %v1012 = vpop.trf.xlu0
    %v1013 = vpop.trf.xlu0
    %v1014 = vpop.trf.xlu0
    %1015 = vxpose.xlu0.b32.start [1/16] %v218, 128
    %1016 = vxpose.xlu0.b32.cont [2/16] %v222, 128
    %1017 = vxpose.xlu0.b32.cont [3/16] %v226, 128
    %1018 = vxpose.xlu0.b32.cont [4/16] %v230, 128
    %1019 = vxpose.xlu0.b32.cont [5/16] %v234, 128
    %1020 = vxpose.xlu0.b32.cont [6/16] %v238, 128
    %1021 = vxpose.xlu0.b32.cont [7/16] %v242, 128
    %1022 = vxpose.xlu0.b32.cont [8/16] %v246, 128
    %1023 = vxpose.xlu0.b32.cont [9/16] %v250, 128
    %1024 = vxpose.xlu0.b32.cont [10/16] %v254, 128
    %1025 = vxpose.xlu0.b32.cont [11/16] %v258, 128
    %1026 = vxpose.xlu0.b32.cont [12/16] %v262, 128
    %1027 = vxpose.xlu0.b32.cont [13/16] %v266, 128
    %1028 = vxpose.xlu0.b32.cont [14/16] %v270, 128
    %1029 = vxpose.xlu0.b32.cont [15/16] %v274, 128
    %1030 = vxpose.xlu0.b32.end [16/16] %v278, 128
    %v1031 = vpop.trf.xlu0
    %v1032 = vpop.trf.xlu0
    %v1033 = vpop.trf.xlu0
    %v1034 = vpop.trf.xlu0
    %v1035 = vpop.trf.xlu0
    %v1036 = vpop.trf.xlu0
    %v1037 = vpop.trf.xlu0
    %v1038 = vpop.trf.xlu0
    %v1039 = vpop.trf.xlu0
    %v1040 = vpop.trf.xlu0
    %v1041 = vpop.trf.xlu0
    %v1042 = vpop.trf.xlu0
    %v1043 = vpop.trf.xlu0
    %v1044 = vpop.trf.xlu0
    %v1045 = vpop.trf.xlu0
    %v1046 = vpop.trf.xlu0
    %1047 = vxpose.xlu0.b32.start [1/16] %v279, 128
    %1048 = vxpose.xlu0.b32.cont [2/16] %v283, 128
    %1049 = vxpose.xlu0.b32.cont [3/16] %v287, 128
    %1050 = vxpose.xlu0.b32.cont [4/16] %v291, 128
    %1051 = vxpose.xlu0.b32.cont [5/16] %v295, 128
    %1052 = vxpose.xlu0.b32.cont [6/16] %v299, 128
    %1053 = vxpose.xlu0.b32.cont [7/16] %v303, 128
    %1054 = vxpose.xlu0.b32.cont [8/16] %v307, 128
    %1055 = vxpose.xlu0.b32.cont [9/16] %v311, 128
    %1056 = vxpose.xlu0.b32.cont [10/16] %v315, 128
    %1057 = vxpose.xlu0.b32.cont [11/16] %v319, 128
    %1058 = vxpose.xlu0.b32.cont [12/16] %v323, 128
    %1059 = vxpose.xlu0.b32.cont [13/16] %v327, 128
    %1060 = vxpose.xlu0.b32.cont [14/16] %v331, 128
    %1061 = vxpose.xlu0.b32.cont [15/16] %v335, 128
    %1062 = vxpose.xlu0.b32.end [16/16] %v339, 128
    %v1063 = vpop.trf.xlu0
    %v1064 = vpop.trf.xlu0
    %v1065 = vpop.trf.xlu0
    %v1066 = vpop.trf.xlu0
    %v1067 = vpop.trf.xlu0
    %v1068 = vpop.trf.xlu0
    %v1069 = vpop.trf.xlu0
    %v1070 = vpop.trf.xlu0
    %v1071 = vpop.trf.xlu0
    %v1072 = vpop.trf.xlu0
    %v1073 = vpop.trf.xlu0
    %v1074 = vpop.trf.xlu0
    %v1075 = vpop.trf.xlu0
    %v1076 = vpop.trf.xlu0
    %v1077 = vpop.trf.xlu0
    %v1078 = vpop.trf.xlu0
    %1079 = vxpose.xlu0.b32.start [1/16] %v280, 128
    %1080 = vxpose.xlu0.b32.cont [2/16] %v284, 128
    %1081 = vxpose.xlu0.b32.cont [3/16] %v288, 128
    %1082 = vxpose.xlu0.b32.cont [4/16] %v292, 128
    %1083 = vxpose.xlu0.b32.cont [5/16] %v296, 128
    %1084 = vxpose.xlu0.b32.cont [6/16] %v300, 128
    %1085 = vxpose.xlu0.b32.cont [7/16] %v304, 128
    %1086 = vxpose.xlu0.b32.cont [8/16] %v308, 128
    %1087 = vxpose.xlu0.b32.cont [9/16] %v312, 128
    %1088 = vxpose.xlu0.b32.cont [10/16] %v316, 128
    %1089 = vxpose.xlu0.b32.cont [11/16] %v320, 128
    %1090 = vxpose.xlu0.b32.cont [12/16] %v324, 128
    %1091 = vxpose.xlu0.b32.cont [13/16] %v328, 128
    %1092 = vxpose.xlu0.b32.cont [14/16] %v332, 128
    %1093 = vxpose.xlu0.b32.cont [15/16] %v336, 128
    %1094 = vxpose.xlu0.b32.end [16/16] %v340, 128
    %v1095 = vpop.trf.xlu0
    %v1096 = vpop.trf.xlu0
    %v1097 = vpop.trf.xlu0
    %v1098 = vpop.trf.xlu0
    %v1099 = vpop.trf.xlu0
    %v1100 = vpop.trf.xlu0
    %v1101 = vpop.trf.xlu0
    %v1102 = vpop.trf.xlu0
    %v1103 = vpop.trf.xlu0
    %v1104 = vpop.trf.xlu0
    %v1105 = vpop.trf.xlu0
    %v1106 = vpop.trf.xlu0
    %v1107 = vpop.trf.xlu0
    %v1108 = vpop.trf.xlu0
    %v1109 = vpop.trf.xlu0
    %v1110 = vpop.trf.xlu0
    %1111 = vxpose.xlu0.b32.start [1/16] %v281, 128
    %1112 = vxpose.xlu0.b32.cont [2/16] %v285, 128
    %1113 = vxpose.xlu0.b32.cont [3/16] %v289, 128
    %1114 = vxpose.xlu0.b32.cont [4/16] %v293, 128
    %1115 = vxpose.xlu0.b32.cont [5/16] %v297, 128
    %1116 = vxpose.xlu0.b32.cont [6/16] %v301, 128
    %1117 = vxpose.xlu0.b32.cont [7/16] %v305, 128
    %1118 = vxpose.xlu0.b32.cont [8/16] %v309, 128
    %1119 = vxpose.xlu0.b32.cont [9/16] %v313, 128
    %1120 = vxpose.xlu0.b32.cont [10/16] %v317, 128
    %1121 = vxpose.xlu0.b32.cont [11/16] %v321, 128
    %1122 = vxpose.xlu0.b32.cont [12/16] %v325, 128
    %1123 = vxpose.xlu0.b32.cont [13/16] %v329, 128
    %1124 = vxpose.xlu0.b32.cont [14/16] %v333, 128
    %1125 = vxpose.xlu0.b32.cont [15/16] %v337, 128
    %1126 = vxpose.xlu0.b32.end [16/16] %v341, 128
    %v1127 = vpop.trf.xlu0
    %v1128 = vpop.trf.xlu0
    %v1129 = vpop.trf.xlu0
    %v1130 = vpop.trf.xlu0
    %v1131 = vpop.trf.xlu0
    %v1132 = vpop.trf.xlu0
    %v1133 = vpop.trf.xlu0
    %v1134 = vpop.trf.xlu0
    %v1135 = vpop.trf.xlu0
    %v1136 = vpop.trf.xlu0
    %v1137 = vpop.trf.xlu0
    %v1138 = vpop.trf.xlu0
    %v1139 = vpop.trf.xlu0
    %v1140 = vpop.trf.xlu0
    %v1141 = vpop.trf.xlu0
    %v1142 = vpop.trf.xlu0
    %1143 = vxpose.xlu0.b32.start [1/16] %v282, 128
    %1144 = vxpose.xlu0.b32.cont [2/16] %v286, 128
    %1145 = vxpose.xlu0.b32.cont [3/16] %v290, 128
    %1146 = vxpose.xlu0.b32.cont [4/16] %v294, 128
    %1147 = vxpose.xlu0.b32.cont [5/16] %v298, 128
    %1148 = vxpose.xlu0.b32.cont [6/16] %v302, 128
    %1149 = vxpose.xlu0.b32.cont [7/16] %v306, 128
    %1150 = vxpose.xlu0.b32.cont [8/16] %v310, 128
    %1151 = vxpose.xlu0.b32.cont [9/16] %v314, 128
    %1152 = vxpose.xlu0.b32.cont [10/16] %v318, 128
    %1153 = vxpose.xlu0.b32.cont [11/16] %v322, 128
    %1154 = vxpose.xlu0.b32.cont [12/16] %v326, 128
    %1155 = vxpose.xlu0.b32.cont [13/16] %v330, 128
    %1156 = vxpose.xlu0.b32.cont [14/16] %v334, 128
    %1157 = vxpose.xlu0.b32.cont [15/16] %v338, 128
    %1158 = vxpose.xlu0.b32.end [16/16] %v342, 128
    %v1159 = vpop.trf.xlu0
    %v1160 = vpop.trf.xlu0
    %v1161 = vpop.trf.xlu0
    %v1162 = vpop.trf.xlu0
    %v1163 = vpop.trf.xlu0
    %v1164 = vpop.trf.xlu0
    %v1165 = vpop.trf.xlu0
    %v1166 = vpop.trf.xlu0
    %v1167 = vpop.trf.xlu0
    %v1168 = vpop.trf.xlu0
    %v1169 = vpop.trf.xlu0
    %v1170 = vpop.trf.xlu0
    %v1171 = vpop.trf.xlu0
    %v1172 = vpop.trf.xlu0
    %v1173 = vpop.trf.xlu0
    %v1174 = vpop.trf.xlu0
    %1175 = vxpose.xlu0.b32.start [1/16] %v343, 128
    %1176 = vxpose.xlu0.b32.cont [2/16] %v347, 128
    %1177 = vxpose.xlu0.b32.cont [3/16] %v351, 128
    %1178 = vxpose.xlu0.b32.cont [4/16] %v355, 128
    %1179 = vxpose.xlu0.b32.cont [5/16] %v359, 128
    %1180 = vxpose.xlu0.b32.cont [6/16] %v363, 128
    %1181 = vxpose.xlu0.b32.cont [7/16] %v367, 128
    %1182 = vxpose.xlu0.b32.cont [8/16] %v371, 128
    %1183 = vxpose.xlu0.b32.cont [9/16] %v375, 128
    %1184 = vxpose.xlu0.b32.cont [10/16] %v379, 128
    %1185 = vxpose.xlu0.b32.cont [11/16] %v383, 128
    %1186 = vxpose.xlu0.b32.cont [12/16] %v387, 128
    %1187 = vxpose.xlu0.b32.cont [13/16] %v391, 128
    %1188 = vxpose.xlu0.b32.cont [14/16] %v395, 128
    %1189 = vxpose.xlu0.b32.cont [15/16] %v399, 128
    %1190 = vxpose.xlu0.b32.end [16/16] %v403, 128
    %v1191 = vpop.trf.xlu0
    %v1192 = vpop.trf.xlu0
    %v1193 = vpop.trf.xlu0
    %v1194 = vpop.trf.xlu0
    %v1195 = vpop.trf.xlu0
    %v1196 = vpop.trf.xlu0
    %v1197 = vpop.trf.xlu0
    %v1198 = vpop.trf.xlu0
    %v1199 = vpop.trf.xlu0
    %v1200 = vpop.trf.xlu0
    %v1201 = vpop.trf.xlu0
    %v1202 = vpop.trf.xlu0
    %v1203 = vpop.trf.xlu0
    %v1204 = vpop.trf.xlu0
    %v1205 = vpop.trf.xlu0
    %v1206 = vpop.trf.xlu0
    %1207 = vxpose.xlu0.b32.start [1/16] %v344, 128
    %1208 = vxpose.xlu0.b32.cont [2/16] %v348, 128
    %1209 = vxpose.xlu0.b32.cont [3/16] %v352, 128
    %1210 = vxpose.xlu0.b32.cont [4/16] %v356, 128
    %1211 = vxpose.xlu0.b32.cont [5/16] %v360, 128
    %1212 = vxpose.xlu0.b32.cont [6/16] %v364, 128
    %1213 = vxpose.xlu0.b32.cont [7/16] %v368, 128
    %1214 = vxpose.xlu0.b32.cont [8/16] %v372, 128
    %1215 = vxpose.xlu0.b32.cont [9/16] %v376, 128
    %1216 = vxpose.xlu0.b32.cont [10/16] %v380, 128
    %1217 = vxpose.xlu0.b32.cont [11/16] %v384, 128
    %1218 = vxpose.xlu0.b32.cont [12/16] %v388, 128
    %1219 = vxpose.xlu0.b32.cont [13/16] %v392, 128
    %1220 = vxpose.xlu0.b32.cont [14/16] %v396, 128
    %1221 = vxpose.xlu0.b32.cont [15/16] %v400, 128
    %1222 = vxpose.xlu0.b32.end [16/16] %v404, 128
    %v1223 = vpop.trf.xlu0
    %v1224 = vpop.trf.xlu0
    %v1225 = vpop.trf.xlu0
    %v1226 = vpop.trf.xlu0
    %v1227 = vpop.trf.xlu0
    %v1228 = vpop.trf.xlu0
    %v1229 = vpop.trf.xlu0
    %v1230 = vpop.trf.xlu0
    %v1231 = vpop.trf.xlu0
    %v1232 = vpop.trf.xlu0
    %v1233 = vpop.trf.xlu0
    %v1234 = vpop.trf.xlu0
    %v1235 = vpop.trf.xlu0
    %v1236 = vpop.trf.xlu0
    %v1237 = vpop.trf.xlu0
    %v1238 = vpop.trf.xlu0
    %1239 = vxpose.xlu0.b32.start [1/16] %v345, 128
    %1240 = vxpose.xlu0.b32.cont [2/16] %v349, 128
    %1241 = vxpose.xlu0.b32.cont [3/16] %v353, 128
    %1242 = vxpose.xlu0.b32.cont [4/16] %v357, 128
    %1243 = vxpose.xlu0.b32.cont [5/16] %v361, 128
    %1244 = vxpose.xlu0.b32.cont [6/16] %v365, 128
    %1245 = vxpose.xlu0.b32.cont [7/16] %v369, 128
    %1246 = vxpose.xlu0.b32.cont [8/16] %v373, 128
    %1247 = vxpose.xlu0.b32.cont [9/16] %v377, 128
    %1248 = vxpose.xlu0.b32.cont [10/16] %v381, 128
    %1249 = vxpose.xlu0.b32.cont [11/16] %v385, 128
    %1250 = vxpose.xlu0.b32.cont [12/16] %v389, 128
    %1251 = vxpose.xlu0.b32.cont [13/16] %v393, 128
    %1252 = vxpose.xlu0.b32.cont [14/16] %v397, 128
    %1253 = vxpose.xlu0.b32.cont [15/16] %v401, 128
    %1254 = vxpose.xlu0.b32.end [16/16] %v405, 128
    %v1255 = vpop.trf.xlu0
    %v1256 = vpop.trf.xlu0
    %v1257 = vpop.trf.xlu0
    %v1258 = vpop.trf.xlu0
    %v1259 = vpop.trf.xlu0
    %v1260 = vpop.trf.xlu0
    %v1261 = vpop.trf.xlu0
    %v1262 = vpop.trf.xlu0
    %v1263 = vpop.trf.xlu0
    %v1264 = vpop.trf.xlu0
    %v1265 = vpop.trf.xlu0
    %v1266 = vpop.trf.xlu0
    %v1267 = vpop.trf.xlu0
    %v1268 = vpop.trf.xlu0
    %v1269 = vpop.trf.xlu0
    %v1270 = vpop.trf.xlu0
    %1271 = vxpose.xlu0.b32.start [1/16] %v346, 128
    %1272 = vxpose.xlu0.b32.cont [2/16] %v350, 128
    %1273 = vxpose.xlu0.b32.cont [3/16] %v354, 128
    %1274 = vxpose.xlu0.b32.cont [4/16] %v358, 128
    %1275 = vxpose.xlu0.b32.cont [5/16] %v362, 128
    %1276 = vxpose.xlu0.b32.cont [6/16] %v366, 128
    %1277 = vxpose.xlu0.b32.cont [7/16] %v370, 128
    %1278 = vxpose.xlu0.b32.cont [8/16] %v374, 128
    %1279 = vxpose.xlu0.b32.cont [9/16] %v378, 128
    %1280 = vxpose.xlu0.b32.cont [10/16] %v382, 128
    %1281 = vxpose.xlu0.b32.cont [11/16] %v386, 128
    %1282 = vxpose.xlu0.b32.cont [12/16] %v390, 128
    %1283 = vxpose.xlu0.b32.cont [13/16] %v394, 128
    %1284 = vxpose.xlu0.b32.cont [14/16] %v398, 128
    %1285 = vxpose.xlu0.b32.cont [15/16] %v402, 128
    %1286 = vxpose.xlu0.b32.end [16/16] %v406, 128
    %v1287 = vpop.trf.xlu0
    %v1288 = vpop.trf.xlu0
    %v1289 = vpop.trf.xlu0
    %v1290 = vpop.trf.xlu0
    %v1291 = vpop.trf.xlu0
    %v1292 = vpop.trf.xlu0
    %v1293 = vpop.trf.xlu0
    %v1294 = vpop.trf.xlu0
    %v1295 = vpop.trf.xlu0
    %v1296 = vpop.trf.xlu0
    %v1297 = vpop.trf.xlu0
    %v1298 = vpop.trf.xlu0
    %v1299 = vpop.trf.xlu0
    %v1300 = vpop.trf.xlu0
    %v1301 = vpop.trf.xlu0
    %v1302 = vpop.trf.xlu0
    %1303 = vxpose.xlu0.b32.start [1/16] %v407, 128
    %1304 = vxpose.xlu0.b32.cont [2/16] %v411, 128
    %1305 = vxpose.xlu0.b32.cont [3/16] %v415, 128
    %1306 = vxpose.xlu0.b32.cont [4/16] %v419, 128
    %1307 = vxpose.xlu0.b32.cont [5/16] %v423, 128
    %1308 = vxpose.xlu0.b32.cont [6/16] %v427, 128
    %1309 = vxpose.xlu0.b32.cont [7/16] %v431, 128
    %1310 = vxpose.xlu0.b32.cont [8/16] %v435, 128
    %1311 = vxpose.xlu0.b32.cont [9/16] %v439, 128
    %1312 = vxpose.xlu0.b32.cont [10/16] %v443, 128
    %1313 = vxpose.xlu0.b32.cont [11/16] %v447, 128
    %1314 = vxpose.xlu0.b32.cont [12/16] %v451, 128
    %1315 = vxpose.xlu0.b32.cont [13/16] %v455, 128
    %1316 = vxpose.xlu0.b32.cont [14/16] %v459, 128
    %1317 = vxpose.xlu0.b32.cont [15/16] %v463, 128
    %1318 = vxpose.xlu0.b32.end [16/16] %v467, 128
    %v1319 = vpop.trf.xlu0
    %v1320 = vpop.trf.xlu0
    %v1321 = vpop.trf.xlu0
    %v1322 = vpop.trf.xlu0
    %v1323 = vpop.trf.xlu0
    %v1324 = vpop.trf.xlu0
    %v1325 = vpop.trf.xlu0
    %v1326 = vpop.trf.xlu0
    %v1327 = vpop.trf.xlu0
    %v1328 = vpop.trf.xlu0
    %v1329 = vpop.trf.xlu0
    %v1330 = vpop.trf.xlu0
    %v1331 = vpop.trf.xlu0
    %v1332 = vpop.trf.xlu0
    %v1333 = vpop.trf.xlu0
    %v1334 = vpop.trf.xlu0
    %1335 = vxpose.xlu0.b32.start [1/16] %v408, 128
    %1336 = vxpose.xlu0.b32.cont [2/16] %v412, 128
    %1337 = vxpose.xlu0.b32.cont [3/16] %v416, 128
    %1338 = vxpose.xlu0.b32.cont [4/16] %v420, 128
    %1339 = vxpose.xlu0.b32.cont [5/16] %v424, 128
    %1340 = vxpose.xlu0.b32.cont [6/16] %v428, 128
    %1341 = vxpose.xlu0.b32.cont [7/16] %v432, 128
    %1342 = vxpose.xlu0.b32.cont [8/16] %v436, 128
    %1343 = vxpose.xlu0.b32.cont [9/16] %v440, 128
    %1344 = vxpose.xlu0.b32.cont [10/16] %v444, 128
    %1345 = vxpose.xlu0.b32.cont [11/16] %v448, 128
    %1346 = vxpose.xlu0.b32.cont [12/16] %v452, 128
    %1347 = vxpose.xlu0.b32.cont [13/16] %v456, 128
    %1348 = vxpose.xlu0.b32.cont [14/16] %v460, 128
    %1349 = vxpose.xlu0.b32.cont [15/16] %v464, 128
    %1350 = vxpose.xlu0.b32.end [16/16] %v468, 128
    %v1351 = vpop.trf.xlu0
    %v1352 = vpop.trf.xlu0
    %v1353 = vpop.trf.xlu0
    %v1354 = vpop.trf.xlu0
    %v1355 = vpop.trf.xlu0
    %v1356 = vpop.trf.xlu0
    %v1357 = vpop.trf.xlu0
    %v1358 = vpop.trf.xlu0
    %v1359 = vpop.trf.xlu0
    %v1360 = vpop.trf.xlu0
    %v1361 = vpop.trf.xlu0
    %v1362 = vpop.trf.xlu0
    %v1363 = vpop.trf.xlu0
    %v1364 = vpop.trf.xlu0
    %v1365 = vpop.trf.xlu0
    %v1366 = vpop.trf.xlu0
    %1367 = vxpose.xlu0.b32.start [1/16] %v409, 128
    %1368 = vxpose.xlu0.b32.cont [2/16] %v413, 128
    %1369 = vxpose.xlu0.b32.cont [3/16] %v417, 128
    %1370 = vxpose.xlu0.b32.cont [4/16] %v421, 128
    %1371 = vxpose.xlu0.b32.cont [5/16] %v425, 128
    %1372 = vxpose.xlu0.b32.cont [6/16] %v429, 128
    %1373 = vxpose.xlu0.b32.cont [7/16] %v433, 128
    %1374 = vxpose.xlu0.b32.cont [8/16] %v437, 128
    %1375 = vxpose.xlu0.b32.cont [9/16] %v441, 128
    %1376 = vxpose.xlu0.b32.cont [10/16] %v445, 128
    %1377 = vxpose.xlu0.b32.cont [11/16] %v449, 128
    %1378 = vxpose.xlu0.b32.cont [12/16] %v453, 128
    %1379 = vxpose.xlu0.b32.cont [13/16] %v457, 128
    %1380 = vxpose.xlu0.b32.cont [14/16] %v461, 128
    %1381 = vxpose.xlu0.b32.cont [15/16] %v465, 128
    %1382 = vxpose.xlu0.b32.end [16/16] %v469, 128
    %v1383 = vpop.trf.xlu0
    %v1384 = vpop.trf.xlu0
    %v1385 = vpop.trf.xlu0
    %v1386 = vpop.trf.xlu0
    %v1387 = vpop.trf.xlu0
    %v1388 = vpop.trf.xlu0
    %v1389 = vpop.trf.xlu0
    %v1390 = vpop.trf.xlu0
    %v1391 = vpop.trf.xlu0
    %v1392 = vpop.trf.xlu0
    %v1393 = vpop.trf.xlu0
    %v1394 = vpop.trf.xlu0
    %v1395 = vpop.trf.xlu0
    %v1396 = vpop.trf.xlu0
    %v1397 = vpop.trf.xlu0
    %v1398 = vpop.trf.xlu0
    %1399 = vxpose.xlu0.b32.start [1/16] %v410, 128
    %1400 = vxpose.xlu0.b32.cont [2/16] %v414, 128
    %1401 = vxpose.xlu0.b32.cont [3/16] %v418, 128
    %1402 = vxpose.xlu0.b32.cont [4/16] %v422, 128
    %1403 = vxpose.xlu0.b32.cont [5/16] %v426, 128
    %1404 = vxpose.xlu0.b32.cont [6/16] %v430, 128
    %1405 = vxpose.xlu0.b32.cont [7/16] %v434, 128
    %1406 = vxpose.xlu0.b32.cont [8/16] %v438, 128
    %1407 = vxpose.xlu0.b32.cont [9/16] %v442, 128
    %1408 = vxpose.xlu0.b32.cont [10/16] %v446, 128
    %1409 = vxpose.xlu0.b32.cont [11/16] %v450, 128
    %1410 = vxpose.xlu0.b32.cont [12/16] %v454, 128
    %1411 = vxpose.xlu0.b32.cont [13/16] %v458, 128
    %1412 = vxpose.xlu0.b32.cont [14/16] %v462, 128
    %1413 = vxpose.xlu0.b32.cont [15/16] %v466, 128
    %1414 = vxpose.xlu0.b32.end [16/16] %v470, 128
    %v1415 = vpop.trf.xlu0
    %v1416 = vpop.trf.xlu0
    %v1417 = vpop.trf.xlu0
    %v1418 = vpop.trf.xlu0
    %v1419 = vpop.trf.xlu0
    %v1420 = vpop.trf.xlu0
    %v1421 = vpop.trf.xlu0
    %v1422 = vpop.trf.xlu0
    %v1423 = vpop.trf.xlu0
    %v1424 = vpop.trf.xlu0
    %v1425 = vpop.trf.xlu0
    %v1426 = vpop.trf.xlu0
    %v1427 = vpop.trf.xlu0
    %v1428 = vpop.trf.xlu0
    %v1429 = vpop.trf.xlu0
    %v1430 = vpop.trf.xlu0
    %1431 = vxpose.xlu0.b32.start [1/16] %v471, 128
    %1432 = vxpose.xlu0.b32.cont [2/16] %v475, 128
    %1433 = vxpose.xlu0.b32.cont [3/16] %v479, 128
    %1434 = vxpose.xlu0.b32.cont [4/16] %v483, 128
    %1435 = vxpose.xlu0.b32.cont [5/16] %v487, 128
    %1436 = vxpose.xlu0.b32.cont [6/16] %v491, 128
    %1437 = vxpose.xlu0.b32.cont [7/16] %v495, 128
    %1438 = vxpose.xlu0.b32.cont [8/16] %v499, 128
    %1439 = vxpose.xlu0.b32.cont [9/16] %v503, 128
    %1440 = vxpose.xlu0.b32.cont [10/16] %v507, 128
    %1441 = vxpose.xlu0.b32.cont [11/16] %v511, 128
    %1442 = vxpose.xlu0.b32.cont [12/16] %v515, 128
    %1443 = vxpose.xlu0.b32.cont [13/16] %v519, 128
    %1444 = vxpose.xlu0.b32.cont [14/16] %v523, 128
    %1445 = vxpose.xlu0.b32.cont [15/16] %v527, 128
    %1446 = vxpose.xlu0.b32.end [16/16] %v531, 128
    %v1447 = vpop.trf.xlu0
    %v1448 = vpop.trf.xlu0
    %v1449 = vpop.trf.xlu0
    %v1450 = vpop.trf.xlu0
    %v1451 = vpop.trf.xlu0
    %v1452 = vpop.trf.xlu0
    %v1453 = vpop.trf.xlu0
    %v1454 = vpop.trf.xlu0
    %v1455 = vpop.trf.xlu0
    %v1456 = vpop.trf.xlu0
    %v1457 = vpop.trf.xlu0
    %v1458 = vpop.trf.xlu0
    %v1459 = vpop.trf.xlu0
    %v1460 = vpop.trf.xlu0
    %v1461 = vpop.trf.xlu0
    %v1462 = vpop.trf.xlu0
    %1463 = vxpose.xlu0.b32.start [1/16] %v472, 128
    %1464 = vxpose.xlu0.b32.cont [2/16] %v476, 128
    %1465 = vxpose.xlu0.b32.cont [3/16] %v480, 128
    %1466 = vxpose.xlu0.b32.cont [4/16] %v484, 128
    %1467 = vxpose.xlu0.b32.cont [5/16] %v488, 128
    %1468 = vxpose.xlu0.b32.cont [6/16] %v492, 128
    %1469 = vxpose.xlu0.b32.cont [7/16] %v496, 128
    %1470 = vxpose.xlu0.b32.cont [8/16] %v500, 128
    %1471 = vxpose.xlu0.b32.cont [9/16] %v504, 128
    %1472 = vxpose.xlu0.b32.cont [10/16] %v508, 128
    %1473 = vxpose.xlu0.b32.cont [11/16] %v512, 128
    %1474 = vxpose.xlu0.b32.cont [12/16] %v516, 128
    %1475 = vxpose.xlu0.b32.cont [13/16] %v520, 128
    %1476 = vxpose.xlu0.b32.cont [14/16] %v524, 128
    %1477 = vxpose.xlu0.b32.cont [15/16] %v528, 128
    %1478 = vxpose.xlu0.b32.end [16/16] %v532, 128
    %v1479 = vpop.trf.xlu0
    %v1480 = vpop.trf.xlu0
    %v1481 = vpop.trf.xlu0
    %v1482 = vpop.trf.xlu0
    %v1483 = vpop.trf.xlu0
    %v1484 = vpop.trf.xlu0
    %v1485 = vpop.trf.xlu0
    %v1486 = vpop.trf.xlu0
    %v1487 = vpop.trf.xlu0
    %v1488 = vpop.trf.xlu0
    %v1489 = vpop.trf.xlu0
    %v1490 = vpop.trf.xlu0
    %v1491 = vpop.trf.xlu0
    %v1492 = vpop.trf.xlu0
    %v1493 = vpop.trf.xlu0
    %v1494 = vpop.trf.xlu0
    %1495 = vxpose.xlu0.b32.start [1/16] %v473, 128
    %1496 = vxpose.xlu0.b32.cont [2/16] %v477, 128
    %1497 = vxpose.xlu0.b32.cont [3/16] %v481, 128
    %1498 = vxpose.xlu0.b32.cont [4/16] %v485, 128
    %1499 = vxpose.xlu0.b32.cont [5/16] %v489, 128
    %1500 = vxpose.xlu0.b32.cont [6/16] %v493, 128
    %1501 = vxpose.xlu0.b32.cont [7/16] %v497, 128
    %1502 = vxpose.xlu0.b32.cont [8/16] %v501, 128
    %1503 = vxpose.xlu0.b32.cont [9/16] %v505, 128
    %1504 = vxpose.xlu0.b32.cont [10/16] %v509, 128
    %1505 = vxpose.xlu0.b32.cont [11/16] %v513, 128
    %1506 = vxpose.xlu0.b32.cont [12/16] %v517, 128
    %1507 = vxpose.xlu0.b32.cont [13/16] %v521, 128
    %1508 = vxpose.xlu0.b32.cont [14/16] %v525, 128
    %1509 = vxpose.xlu0.b32.cont [15/16] %v529, 128
    %1510 = vxpose.xlu0.b32.end [16/16] %v533, 128
    %v1511 = vpop.trf.xlu0
    %v1512 = vpop.trf.xlu0
    %v1513 = vpop.trf.xlu0
    %v1514 = vpop.trf.xlu0
    %v1515 = vpop.trf.xlu0
    %v1516 = vpop.trf.xlu0
    %v1517 = vpop.trf.xlu0
    %v1518 = vpop.trf.xlu0
    %v1519 = vpop.trf.xlu0
    %v1520 = vpop.trf.xlu0
    %v1521 = vpop.trf.xlu0
    %v1522 = vpop.trf.xlu0
    %v1523 = vpop.trf.xlu0
    %v1524 = vpop.trf.xlu0
    %v1525 = vpop.trf.xlu0
    %v1526 = vpop.trf.xlu0
    %1527 = vxpose.xlu0.b32.start [1/16] %v474, 128
    %1528 = vxpose.xlu0.b32.cont [2/16] %v478, 128
    %1529 = vxpose.xlu0.b32.cont [3/16] %v482, 128
    %1530 = vxpose.xlu0.b32.cont [4/16] %v486, 128
    %1531 = vxpose.xlu0.b32.cont [5/16] %v490, 128
    %1532 = vxpose.xlu0.b32.cont [6/16] %v494, 128
    %1533 = vxpose.xlu0.b32.cont [7/16] %v498, 128
    %1534 = vxpose.xlu0.b32.cont [8/16] %v502, 128
    %1535 = vxpose.xlu0.b32.cont [9/16] %v506, 128
    %1536 = vxpose.xlu0.b32.cont [10/16] %v510, 128
    %1537 = vxpose.xlu0.b32.cont [11/16] %v514, 128
    %1538 = vxpose.xlu0.b32.cont [12/16] %v518, 128
    %1539 = vxpose.xlu0.b32.cont [13/16] %v522, 128
    %1540 = vxpose.xlu0.b32.cont [14/16] %v526, 128
    %1541 = vxpose.xlu0.b32.cont [15/16] %v530, 128
    %1542 = vxpose.xlu0.b32.end [16/16] %v534, 128
    %v1543 = vpop.trf.xlu0
    %v1544 = vpop.trf.xlu0
    %v1545 = vpop.trf.xlu0
    %v1546 = vpop.trf.xlu0
    %v1547 = vpop.trf.xlu0
    %v1548 = vpop.trf.xlu0
    %v1549 = vpop.trf.xlu0
    %v1550 = vpop.trf.xlu0
    %v1551 = vpop.trf.xlu0
    %v1552 = vpop.trf.xlu0
    %v1553 = vpop.trf.xlu0
    %v1554 = vpop.trf.xlu0
    %v1555 = vpop.trf.xlu0
    %v1556 = vpop.trf.xlu0
    %v1557 = vpop.trf.xlu0
    %v1558 = vpop.trf.xlu0
    %1559 = vst [vmem:[#allocation5] sm:$0xff] %v551
    %1560 = vst [vmem:[#allocation5 + $0x8] sm:$0xff] %v679
    %1561 = vst [vmem:[#allocation5 + $0x10] sm:$0xff] %v552
    %1562 = vst [vmem:[#allocation5 + $0x18] sm:$0xff] %v680
    %1563 = vst [vmem:[#allocation5 + $0x20] sm:$0xff] %v553
    %1564 = vst [vmem:[#allocation5 + $0x28] sm:$0xff] %v681
    %1565 = vst [vmem:[#allocation5 + $0x30] sm:$0xff] %v554
    %1566 = vst [vmem:[#allocation5 + $0x38] sm:$0xff] %v682
    %1567 = vst [vmem:[#allocation5 + $0x40] sm:$0xff] %v555
    %1568 = vst [vmem:[#allocation5 + $0x48] sm:$0xff] %v683
    %1569 = vst [vmem:[#allocation5 + $0x50] sm:$0xff] %v556
    %1570 = vst [vmem:[#allocation5 + $0x58] sm:$0xff] %v684
    %1571 = vst [vmem:[#allocation5 + $0x60] sm:$0xff] %v557
    %1572 = vst [vmem:[#allocation5 + $0x68] sm:$0xff] %v685
    %1573 = vst [vmem:[#allocation5 + $0x70] sm:$0xff] %v558
    %1574 = vst [vmem:[#allocation5 + $0x78] sm:$0xff] %v686
    %1575 = vst [vmem:[#allocation5 + $0x80] sm:$0xff] %v559
    %1576 = vst [vmem:[#allocation5 + $0x88] sm:$0xff] %v687
    %1577 = vst [vmem:[#allocation5 + $0x90] sm:$0xff] %v560
    %1578 = vst [vmem:[#allocation5 + $0x98] sm:$0xff] %v688
    %1579 = vst [vmem:[#allocation5 + $0xa0] sm:$0xff] %v561
    %1580 = vst [vmem:[#allocation5 + $0xa8] sm:$0xff] %v689
    %1581 = vst [vmem:[#allocation5 + $0xb0] sm:$0xff] %v562
    %1582 = vst [vmem:[#allocation5 + $0xb8] sm:$0xff] %v690
    %1583 = vst [vmem:[#allocation5 + $0xc0] sm:$0xff] %v563
    %1584 = vst [vmem:[#allocation5 + $0xc8] sm:$0xff] %v691
    %1585 = vst [vmem:[#allocation5 + $0xd0] sm:$0xff] %v564
    %1586 = vst [vmem:[#allocation5 + $0xd8] sm:$0xff] %v692
    %1587 = vst [vmem:[#allocation5 + $0xe0] sm:$0xff] %v565
    %1588 = vst [vmem:[#allocation5 + $0xe8] sm:$0xff] %v693
    %1589 = vst [vmem:[#allocation5 + $0xf0] sm:$0xff] %v566
    %1590 = vst [vmem:[#allocation5 + $0xf8] sm:$0xff] %v694
    %1591 = vst [vmem:[#allocation5 + $0x100] sm:$0xff] %v583
    %1592 = vst [vmem:[#allocation5 + $0x108] sm:$0xff] %v711
    %1593 = vst [vmem:[#allocation5 + $0x110] sm:$0xff] %v584
    %1594 = vst [vmem:[#allocation5 + $0x118] sm:$0xff] %v712
    %1595 = vst [vmem:[#allocation5 + $0x120] sm:$0xff] %v585
    %1596 = vst [vmem:[#allocation5 + $0x128] sm:$0xff] %v713
    %1597 = vst [vmem:[#allocation5 + $0x130] sm:$0xff] %v586
    %1598 = vst [vmem:[#allocation5 + $0x138] sm:$0xff] %v714
    %1599 = vst [vmem:[#allocation5 + $0x140] sm:$0xff] %v587
    %1600 = vst [vmem:[#allocation5 + $0x148] sm:$0xff] %v715
    %1601 = vst [vmem:[#allocation5 + $0x150] sm:$0xff] %v588
    %1602 = vst [vmem:[#allocation5 + $0x158] sm:$0xff] %v716
    %1603 = vst [vmem:[#allocation5 + $0x160] sm:$0xff] %v589
    %1604 = vst [vmem:[#allocation5 + $0x168] sm:$0xff] %v717
    %1605 = vst [vmem:[#allocation5 + $0x170] sm:$0xff] %v590
    %1606 = vst [vmem:[#allocation5 + $0x178] sm:$0xff] %v718
    %1607 = vst [vmem:[#allocation5 + $0x180] sm:$0xff] %v591
    %1608 = vst [vmem:[#allocation5 + $0x188] sm:$0xff] %v719
    %1609 = vst [vmem:[#allocation5 + $0x190] sm:$0xff] %v592
    %1610 = vst [vmem:[#allocation5 + $0x198] sm:$0xff] %v720
    %1611 = vst [vmem:[#allocation5 + $0x1a0] sm:$0xff] %v593
    %1612 = vst [vmem:[#allocation5 + $0x1a8] sm:$0xff] %v721
    %1613 = vst [vmem:[#allocation5 + $0x1b0] sm:$0xff] %v594
    %1614 = vst [vmem:[#allocation5 + $0x1b8] sm:$0xff] %v722
    %1615 = vst [vmem:[#allocation5 + $0x1c0] sm:$0xff] %v595
    %1616 = vst [vmem:[#allocation5 + $0x1c8] sm:$0xff] %v723
    %1617 = vst [vmem:[#allocation5 + $0x1d0] sm:$0xff] %v596
    %1618 = vst [vmem:[#allocation5 + $0x1d8] sm:$0xff] %v724
    %1619 = vst [vmem:[#allocation5 + $0x1e0] sm:$0xff] %v597
    %1620 = vst [vmem:[#allocation5 + $0x1e8] sm:$0xff] %v725
    %1621 = vst [vmem:[#allocation5 + $0x1f0] sm:$0xff] %v598
    %1622 = vst [vmem:[#allocation5 + $0x1f8] sm:$0xff] %v726
    %1623 = vst [vmem:[#allocation5 + $0x200] sm:$0xff] %v615
    %1624 = vst [vmem:[#allocation5 + $0x208] sm:$0xff] %v743
    %1625 = vst [vmem:[#allocation5 + $0x210] sm:$0xff] %v616
    %1626 = vst [vmem:[#allocation5 + $0x218] sm:$0xff] %v744
    %1627 = vst [vmem:[#allocation5 + $0x220] sm:$0xff] %v617
    %1628 = vst [vmem:[#allocation5 + $0x228] sm:$0xff] %v745
    %1629 = vst [vmem:[#allocation5 + $0x230] sm:$0xff] %v618
    %1630 = vst [vmem:[#allocation5 + $0x238] sm:$0xff] %v746
    %1631 = vst [vmem:[#allocation5 + $0x240] sm:$0xff] %v619
    %1632 = vst [vmem:[#allocation5 + $0x248] sm:$0xff] %v747
    %1633 = vst [vmem:[#allocation5 + $0x250] sm:$0xff] %v620
    %1634 = vst [vmem:[#allocation5 + $0x258] sm:$0xff] %v748
    %1635 = vst [vmem:[#allocation5 + $0x260] sm:$0xff] %v621
    %1636 = vst [vmem:[#allocation5 + $0x268] sm:$0xff] %v749
    %1637 = vst [vmem:[#allocation5 + $0x270] sm:$0xff] %v622
    %1638 = vst [vmem:[#allocation5 + $0x278] sm:$0xff] %v750
    %1639 = vst [vmem:[#allocation5 + $0x280] sm:$0xff] %v623
    %1640 = vst [vmem:[#allocation5 + $0x288] sm:$0xff] %v751
    %1641 = vst [vmem:[#allocation5 + $0x290] sm:$0xff] %v624
    %1642 = vst [vmem:[#allocation5 + $0x298] sm:$0xff] %v752
    %1643 = vst [vmem:[#allocation5 + $0x2a0] sm:$0xff] %v625
    %1644 = vst [vmem:[#allocation5 + $0x2a8] sm:$0xff] %v753
    %1645 = vst [vmem:[#allocation5 + $0x2b0] sm:$0xff] %v626
    %1646 = vst [vmem:[#allocation5 + $0x2b8] sm:$0xff] %v754
    %1647 = vst [vmem:[#allocation5 + $0x2c0] sm:$0xff] %v627
    %1648 = vst [vmem:[#allocation5 + $0x2c8] sm:$0xff] %v755
    %1649 = vst [vmem:[#allocation5 + $0x2d0] sm:$0xff] %v628
    %1650 = vst [vmem:[#allocation5 + $0x2d8] sm:$0xff] %v756
    %1651 = vst [vmem:[#allocation5 + $0x2e0] sm:$0xff] %v629
    %1652 = vst [vmem:[#allocation5 + $0x2e8] sm:$0xff] %v757
    %1653 = vst [vmem:[#allocation5 + $0x2f0] sm:$0xff] %v630
    %1654 = vst [vmem:[#allocation5 + $0x2f8] sm:$0xff] %v758
    %1655 = vst [vmem:[#allocation5 + $0x300] sm:$0xff] %v647
    %1656 = vst [vmem:[#allocation5 + $0x308] sm:$0xff] %v775
    %1657 = vst [vmem:[#allocation5 + $0x310] sm:$0xff] %v648
    %1658 = vst [vmem:[#allocation5 + $0x318] sm:$0xff] %v776
    %1659 = vst [vmem:[#allocation5 + $0x320] sm:$0xff] %v649
    %1660 = vst [vmem:[#allocation5 + $0x328] sm:$0xff] %v777
    %1661 = vst [vmem:[#allocation5 + $0x330] sm:$0xff] %v650
    %1662 = vst [vmem:[#allocation5 + $0x338] sm:$0xff] %v778
    %1663 = vst [vmem:[#allocation5 + $0x340] sm:$0xff] %v651
    %1664 = vst [vmem:[#allocation5 + $0x348] sm:$0xff] %v779
    %1665 = vst [vmem:[#allocation5 + $0x350] sm:$0xff] %v652
    %1666 = vst [vmem:[#allocation5 + $0x358] sm:$0xff] %v780
    %1667 = vst [vmem:[#allocation5 + $0x360] sm:$0xff] %v653
    %1668 = vst [vmem:[#allocation5 + $0x368] sm:$0xff] %v781
    %1669 = vst [vmem:[#allocation5 + $0x370] sm:$0xff] %v654
    %1670 = vst [vmem:[#allocation5 + $0x378] sm:$0xff] %v782
    %1671 = vst [vmem:[#allocation5 + $0x380] sm:$0xff] %v655
    %1672 = vst [vmem:[#allocation5 + $0x388] sm:$0xff] %v783
    %1673 = vst [vmem:[#allocation5 + $0x390] sm:$0xff] %v656
    %1674 = vst [vmem:[#allocation5 + $0x398] sm:$0xff] %v784
    %1675 = vst [vmem:[#allocation5 + $0x3a0] sm:$0xff] %v657
    %1676 = vst [vmem:[#allocation5 + $0x3a8] sm:$0xff] %v785
    %1677 = vst [vmem:[#allocation5 + $0x3b0] sm:$0xff] %v658
    %1678 = vst [vmem:[#allocation5 + $0x3b8] sm:$0xff] %v786
    %1679 = vst [vmem:[#allocation5 + $0x3c0] sm:$0xff] %v659
    %1680 = vst [vmem:[#allocation5 + $0x3c8] sm:$0xff] %v787
    %1681 = vst [vmem:[#allocation5 + $0x3d0] sm:$0xff] %v660
    %1682 = vst [vmem:[#allocation5 + $0x3d8] sm:$0xff] %v788
    %1683 = vst [vmem:[#allocation5 + $0x3e0] sm:$0xff] %v661
    %1684 = vst [vmem:[#allocation5 + $0x3e8] sm:$0xff] %v789
    %1685 = vst [vmem:[#allocation5 + $0x3f0] sm:$0xff] %v662
    %1686 = vst [vmem:[#allocation5 + $0x3f8] sm:$0xff] %v790
    %1687 = vst [vmem:[#allocation5 + $0x400] sm:$0xff] %v807
    %1688 = vst [vmem:[#allocation5 + $0x408] sm:$0xff] %v935
    %1689 = vst [vmem:[#allocation5 + $0x410] sm:$0xff] %v808
    %1690 = vst [vmem:[#allocation5 + $0x418] sm:$0xff] %v936
    %1691 = vst [vmem:[#allocation5 + $0x420] sm:$0xff] %v809
    %1692 = vst [vmem:[#allocation5 + $0x428] sm:$0xff] %v937
    %1693 = vst [vmem:[#allocation5 + $0x430] sm:$0xff] %v810
    %1694 = vst [vmem:[#allocation5 + $0x438] sm:$0xff] %v938
    %1695 = vst [vmem:[#allocation5 + $0x440] sm:$0xff] %v811
    %1696 = vst [vmem:[#allocation5 + $0x448] sm:$0xff] %v939
    %1697 = vst [vmem:[#allocation5 + $0x450] sm:$0xff] %v812
    %1698 = vst [vmem:[#allocation5 + $0x458] sm:$0xff] %v940
    %1699 = vst [vmem:[#allocation5 + $0x460] sm:$0xff] %v813
    %1700 = vst [vmem:[#allocation5 + $0x468] sm:$0xff] %v941
    %1701 = vst [vmem:[#allocation5 + $0x470] sm:$0xff] %v814
    %1702 = vst [vmem:[#allocation5 + $0x478] sm:$0xff] %v942
    %1703 = vst [vmem:[#allocation5 + $0x480] sm:$0xff] %v815
    %1704 = vst [vmem:[#allocation5 + $0x488] sm:$0xff] %v943
    %1705 = vst [vmem:[#allocation5 + $0x490] sm:$0xff] %v816
    %1706 = vst [vmem:[#allocation5 + $0x498] sm:$0xff] %v944
    %1707 = vst [vmem:[#allocation5 + $0x4a0] sm:$0xff] %v817
    %1708 = vst [vmem:[#allocation5 + $0x4a8] sm:$0xff] %v945
    %1709 = vst [vmem:[#allocation5 + $0x4b0] sm:$0xff] %v818
    %1710 = vst [vmem:[#allocation5 + $0x4b8] sm:$0xff] %v946
    %1711 = vst [vmem:[#allocation5 + $0x4c0] sm:$0xff] %v819
    %1712 = vst [vmem:[#allocation5 + $0x4c8] sm:$0xff] %v947
    %1713 = vst [vmem:[#allocation5 + $0x4d0] sm:$0xff] %v820
    %1714 = vst [vmem:[#allocation5 + $0x4d8] sm:$0xff] %v948
    %1715 = vst [vmem:[#allocation5 + $0x4e0] sm:$0xff] %v821
    %1716 = vst [vmem:[#allocation5 + $0x4e8] sm:$0xff] %v949
    %1717 = vst [vmem:[#allocation5 + $0x4f0] sm:$0xff] %v822
    %1718 = vst [vmem:[#allocation5 + $0x4f8] sm:$0xff] %v950
    %1719 = vst [vmem:[#allocation5 + $0x500] sm:$0xff] %v839
    %1720 = vst [vmem:[#allocation5 + $0x508] sm:$0xff] %v967
    %1721 = vst [vmem:[#allocation5 + $0x510] sm:$0xff] %v840
    %1722 = vst [vmem:[#allocation5 + $0x518] sm:$0xff] %v968
    %1723 = vst [vmem:[#allocation5 + $0x520] sm:$0xff] %v841
    %1724 = vst [vmem:[#allocation5 + $0x528] sm:$0xff] %v969
    %1725 = vst [vmem:[#allocation5 + $0x530] sm:$0xff] %v842
    %1726 = vst [vmem:[#allocation5 + $0x538] sm:$0xff] %v970
    %1727 = vst [vmem:[#allocation5 + $0x540] sm:$0xff] %v843
    %1728 = vst [vmem:[#allocation5 + $0x548] sm:$0xff] %v971
    %1729 = vst [vmem:[#allocation5 + $0x550] sm:$0xff] %v844
    %1730 = vst [vmem:[#allocation5 + $0x558] sm:$0xff] %v972
    %1731 = vst [vmem:[#allocation5 + $0x560] sm:$0xff] %v845
    %1732 = vst [vmem:[#allocation5 + $0x568] sm:$0xff] %v973
    %1733 = vst [vmem:[#allocation5 + $0x570] sm:$0xff] %v846
    %1734 = vst [vmem:[#allocation5 + $0x578] sm:$0xff] %v974
    %1735 = vst [vmem:[#allocation5 + $0x580] sm:$0xff] %v847
    %1736 = vst [vmem:[#allocation5 + $0x588] sm:$0xff] %v975
    %1737 = vst [vmem:[#allocation5 + $0x590] sm:$0xff] %v848
    %1738 = vst [vmem:[#allocation5 + $0x598] sm:$0xff] %v976
    %1739 = vst [vmem:[#allocation5 + $0x5a0] sm:$0xff] %v849
    %1740 = vst [vmem:[#allocation5 + $0x5a8] sm:$0xff] %v977
    %1741 = vst [vmem:[#allocation5 + $0x5b0] sm:$0xff] %v850
    %1742 = vst [vmem:[#allocation5 + $0x5b8] sm:$0xff] %v978
    %1743 = vst [vmem:[#allocation5 + $0x5c0] sm:$0xff] %v851
    %1744 = vst [vmem:[#allocation5 + $0x5c8] sm:$0xff] %v979
    %1745 = vst [vmem:[#allocation5 + $0x5d0] sm:$0xff] %v852
    %1746 = vst [vmem:[#allocation5 + $0x5d8] sm:$0xff] %v980
    %1747 = vst [vmem:[#allocation5 + $0x5e0] sm:$0xff] %v853
    %1748 = vst [vmem:[#allocation5 + $0x5e8] sm:$0xff] %v981
    %1749 = vst [vmem:[#allocation5 + $0x5f0] sm:$0xff] %v854
    %1750 = vst [vmem:[#allocation5 + $0x5f8] sm:$0xff] %v982
    %1751 = vst [vmem:[#allocation5 + $0x600] sm:$0xff] %v871
    %1752 = vst [vmem:[#allocation5 + $0x608] sm:$0xff] %v999
    %1753 = vst [vmem:[#allocation5 + $0x610] sm:$0xff] %v872
    %1754 = vst [vmem:[#allocation5 + $0x618] sm:$0xff] %v1000
    %1755 = vst [vmem:[#allocation5 + $0x620] sm:$0xff] %v873
    %1756 = vst [vmem:[#allocation5 + $0x628] sm:$0xff] %v1001
    %1757 = vst [vmem:[#allocation5 + $0x630] sm:$0xff] %v874
    %1758 = vst [vmem:[#allocation5 + $0x638] sm:$0xff] %v1002
    %1759 = vst [vmem:[#allocation5 + $0x640] sm:$0xff] %v875
    %1760 = vst [vmem:[#allocation5 + $0x648] sm:$0xff] %v1003
    %1761 = vst [vmem:[#allocation5 + $0x650] sm:$0xff] %v876
    %1762 = vst [vmem:[#allocation5 + $0x658] sm:$0xff] %v1004
    %1763 = vst [vmem:[#allocation5 + $0x660] sm:$0xff] %v877
    %1764 = vst [vmem:[#allocation5 + $0x668] sm:$0xff] %v1005
    %1765 = vst [vmem:[#allocation5 + $0x670] sm:$0xff] %v878
    %1766 = vst [vmem:[#allocation5 + $0x678] sm:$0xff] %v1006
    %1767 = vst [vmem:[#allocation5 + $0x680] sm:$0xff] %v879
    %1768 = vst [vmem:[#allocation5 + $0x688] sm:$0xff] %v1007
    %1769 = vst [vmem:[#allocation5 + $0x690] sm:$0xff] %v880
    %1770 = vst [vmem:[#allocation5 + $0x698] sm:$0xff] %v1008
    %1771 = vst [vmem:[#allocation5 + $0x6a0] sm:$0xff] %v881
    %1772 = vst [vmem:[#allocation5 + $0x6a8] sm:$0xff] %v1009
    %1773 = vst [vmem:[#allocation5 + $0x6b0] sm:$0xff] %v882
    %1774 = vst [vmem:[#allocation5 + $0x6b8] sm:$0xff] %v1010
    %1775 = vst [vmem:[#allocation5 + $0x6c0] sm:$0xff] %v883
    %1776 = vst [vmem:[#allocation5 + $0x6c8] sm:$0xff] %v1011
    %1777 = vst [vmem:[#allocation5 + $0x6d0] sm:$0xff] %v884
    %1778 = vst [vmem:[#allocation5 + $0x6d8] sm:$0xff] %v1012
    %1779 = vst [vmem:[#allocation5 + $0x6e0] sm:$0xff] %v885
    %1780 = vst [vmem:[#allocation5 + $0x6e8] sm:$0xff] %v1013
    %1781 = vst [vmem:[#allocation5 + $0x6f0] sm:$0xff] %v886
    %1782 = vst [vmem:[#allocation5 + $0x6f8] sm:$0xff] %v1014
    %1783 = vst [vmem:[#allocation5 + $0x700] sm:$0xff] %v903
    %1784 = vst [vmem:[#allocation5 + $0x708] sm:$0xff] %v1031
    %1785 = vst [vmem:[#allocation5 + $0x710] sm:$0xff] %v904
    %1786 = vst [vmem:[#allocation5 + $0x718] sm:$0xff] %v1032
    %1787 = vst [vmem:[#allocation5 + $0x720] sm:$0xff] %v905
    %1788 = vst [vmem:[#allocation5 + $0x728] sm:$0xff] %v1033
    %1789 = vst [vmem:[#allocation5 + $0x730] sm:$0xff] %v906
    %1790 = vst [vmem:[#allocation5 + $0x738] sm:$0xff] %v1034
    %1791 = vst [vmem:[#allocation5 + $0x740] sm:$0xff] %v907
    %1792 = vst [vmem:[#allocation5 + $0x748] sm:$0xff] %v1035
    %1793 = vst [vmem:[#allocation5 + $0x750] sm:$0xff] %v908
    %1794 = vst [vmem:[#allocation5 + $0x758] sm:$0xff] %v1036
    %1795 = vst [vmem:[#allocation5 + $0x760] sm:$0xff] %v909
    %1796 = vst [vmem:[#allocation5 + $0x768] sm:$0xff] %v1037
    %1797 = vst [vmem:[#allocation5 + $0x770] sm:$0xff] %v910
    %1798 = vst [vmem:[#allocation5 + $0x778] sm:$0xff] %v1038
    %1799 = vst [vmem:[#allocation5 + $0x780] sm:$0xff] %v911
    %1800 = vst [vmem:[#allocation5 + $0x788] sm:$0xff] %v1039
    %1801 = vst [vmem:[#allocation5 + $0x790] sm:$0xff] %v912
    %1802 = vst [vmem:[#allocation5 + $0x798] sm:$0xff] %v1040
    %1803 = vst [vmem:[#allocation5 + $0x7a0] sm:$0xff] %v913
    %1804 = vst [vmem:[#allocation5 + $0x7a8] sm:$0xff] %v1041
    %1805 = vst [vmem:[#allocation5 + $0x7b0] sm:$0xff] %v914
    %1806 = vst [vmem:[#allocation5 + $0x7b8] sm:$0xff] %v1042
    %1807 = vst [vmem:[#allocation5 + $0x7c0] sm:$0xff] %v915
    %1808 = vst [vmem:[#allocation5 + $0x7c8] sm:$0xff] %v1043
    %1809 = vst [vmem:[#allocation5 + $0x7d0] sm:$0xff] %v916
    %1810 = vst [vmem:[#allocation5 + $0x7d8] sm:$0xff] %v1044
    %1811 = vst [vmem:[#allocation5 + $0x7e0] sm:$0xff] %v917
    %1812 = vst [vmem:[#allocation5 + $0x7e8] sm:$0xff] %v1045
    %1813 = vst [vmem:[#allocation5 + $0x7f0] sm:$0xff] %v918
    %1814 = vst [vmem:[#allocation5 + $0x7f8] sm:$0xff] %v1046
    %1815 = vst [vmem:[#allocation5 + $0x800] sm:$0xff] %v1063
    %1816 = vst [vmem:[#allocation5 + $0x808] sm:$0xff] %v1191
    %1817 = vst [vmem:[#allocation5 + $0x810] sm:$0xff] %v1064
    %1818 = vst [vmem:[#allocation5 + $0x818] sm:$0xff] %v1192
    %1819 = vst [vmem:[#allocation5 + $0x820] sm:$0xff] %v1065
    %1820 = vst [vmem:[#allocation5 + $0x828] sm:$0xff] %v1193
    %1821 = vst [vmem:[#allocation5 + $0x830] sm:$0xff] %v1066
    %1822 = vst [vmem:[#allocation5 + $0x838] sm:$0xff] %v1194
    %1823 = vst [vmem:[#allocation5 + $0x840] sm:$0xff] %v1067
    %1824 = vst [vmem:[#allocation5 + $0x848] sm:$0xff] %v1195
    %1825 = vst [vmem:[#allocation5 + $0x850] sm:$0xff] %v1068
    %1826 = vst [vmem:[#allocation5 + $0x858] sm:$0xff] %v1196
    %1827 = vst [vmem:[#allocation5 + $0x860] sm:$0xff] %v1069
    %1828 = vst [vmem:[#allocation5 + $0x868] sm:$0xff] %v1197
    %1829 = vst [vmem:[#allocation5 + $0x870] sm:$0xff] %v1070
    %1830 = vst [vmem:[#allocation5 + $0x878] sm:$0xff] %v1198
    %1831 = vst [vmem:[#allocation5 + $0x880] sm:$0xff] %v1071
    %1832 = vst [vmem:[#allocation5 + $0x888] sm:$0xff] %v1199
    %1833 = vst [vmem:[#allocation5 + $0x890] sm:$0xff] %v1072
    %1834 = vst [vmem:[#allocation5 + $0x898] sm:$0xff] %v1200
    %1835 = vst [vmem:[#allocation5 + $0x8a0] sm:$0xff] %v1073
    %1836 = vst [vmem:[#allocation5 + $0x8a8] sm:$0xff] %v1201
    %1837 = vst [vmem:[#allocation5 + $0x8b0] sm:$0xff] %v1074
    %1838 = vst [vmem:[#allocation5 + $0x8b8] sm:$0xff] %v1202
    %1839 = vst [vmem:[#allocation5 + $0x8c0] sm:$0xff] %v1075
    %1840 = vst [vmem:[#allocation5 + $0x8c8] sm:$0xff] %v1203
    %1841 = vst [vmem:[#allocation5 + $0x8d0] sm:$0xff] %v1076
    %1842 = vst [vmem:[#allocation5 + $0x8d8] sm:$0xff] %v1204
    %1843 = vst [vmem:[#allocation5 + $0x8e0] sm:$0xff] %v1077
    %1844 = vst [vmem:[#allocation5 + $0x8e8] sm:$0xff] %v1205
    %1845 = vst [vmem:[#allocation5 + $0x8f0] sm:$0xff] %v1078
    %1846 = vst [vmem:[#allocation5 + $0x8f8] sm:$0xff] %v1206
    %1847 = vst [vmem:[#allocation5 + $0x900] sm:$0xff] %v1095
    %1848 = vst [vmem:[#allocation5 + $0x908] sm:$0xff] %v1223
    %1849 = vst [vmem:[#allocation5 + $0x910] sm:$0xff] %v1096
    %1850 = vst [vmem:[#allocation5 + $0x918] sm:$0xff] %v1224
    %1851 = vst [vmem:[#allocation5 + $0x920] sm:$0xff] %v1097
    %1852 = vst [vmem:[#allocation5 + $0x928] sm:$0xff] %v1225
    %1853 = vst [vmem:[#allocation5 + $0x930] sm:$0xff] %v1098
    %1854 = vst [vmem:[#allocation5 + $0x938] sm:$0xff] %v1226
    %1855 = vst [vmem:[#allocation5 + $0x940] sm:$0xff] %v1099
    %1856 = vst [vmem:[#allocation5 + $0x948] sm:$0xff] %v1227
    %1857 = vst [vmem:[#allocation5 + $0x950] sm:$0xff] %v1100
    %1858 = vst [vmem:[#allocation5 + $0x958] sm:$0xff] %v1228
    %1859 = vst [vmem:[#allocation5 + $0x960] sm:$0xff] %v1101
    %1860 = vst [vmem:[#allocation5 + $0x968] sm:$0xff] %v1229
    %1861 = vst [vmem:[#allocation5 + $0x970] sm:$0xff] %v1102
    %1862 = vst [vmem:[#allocation5 + $0x978] sm:$0xff] %v1230
    %1863 = vst [vmem:[#allocation5 + $0x980] sm:$0xff] %v1103
    %1864 = vst [vmem:[#allocation5 + $0x988] sm:$0xff] %v1231
    %1865 = vst [vmem:[#allocation5 + $0x990] sm:$0xff] %v1104
    %1866 = vst [vmem:[#allocation5 + $0x998] sm:$0xff] %v1232
    %1867 = vst [vmem:[#allocation5 + $0x9a0] sm:$0xff] %v1105
    %1868 = vst [vmem:[#allocation5 + $0x9a8] sm:$0xff] %v1233
    %1869 = vst [vmem:[#allocation5 + $0x9b0] sm:$0xff] %v1106
    %1870 = vst [vmem:[#allocation5 + $0x9b8] sm:$0xff] %v1234
    %1871 = vst [vmem:[#allocation5 + $0x9c0] sm:$0xff] %v1107
    %1872 = vst [vmem:[#allocation5 + $0x9c8] sm:$0xff] %v1235
    %1873 = vst [vmem:[#allocation5 + $0x9d0] sm:$0xff] %v1108
    %1874 = vst [vmem:[#allocation5 + $0x9d8] sm:$0xff] %v1236
    %1875 = vst [vmem:[#allocation5 + $0x9e0] sm:$0xff] %v1109
    %1876 = vst [vmem:[#allocation5 + $0x9e8] sm:$0xff] %v1237
    %1877 = vst [vmem:[#allocation5 + $0x9f0] sm:$0xff] %v1110
    %1878 = vst [vmem:[#allocation5 + $0x9f8] sm:$0xff] %v1238
    %1879 = vst [vmem:[#allocation5 + $0xa00] sm:$0xff] %v1127
    %1880 = vst [vmem:[#allocation5 + $0xa08] sm:$0xff] %v1255
    %1881 = vst [vmem:[#allocation5 + $0xa10] sm:$0xff] %v1128
    %1882 = vst [vmem:[#allocation5 + $0xa18] sm:$0xff] %v1256
    %1883 = vst [vmem:[#allocation5 + $0xa20] sm:$0xff] %v1129
    %1884 = vst [vmem:[#allocation5 + $0xa28] sm:$0xff] %v1257
    %1885 = vst [vmem:[#allocation5 + $0xa30] sm:$0xff] %v1130
    %1886 = vst [vmem:[#allocation5 + $0xa38] sm:$0xff] %v1258
    %1887 = vst [vmem:[#allocation5 + $0xa40] sm:$0xff] %v1131
    %1888 = vst [vmem:[#allocation5 + $0xa48] sm:$0xff] %v1259
    %1889 = vst [vmem:[#allocation5 + $0xa50] sm:$0xff] %v1132
    %1890 = vst [vmem:[#allocation5 + $0xa58] sm:$0xff] %v1260
    %1891 = vst [vmem:[#allocation5 + $0xa60] sm:$0xff] %v1133
    %1892 = vst [vmem:[#allocation5 + $0xa68] sm:$0xff] %v1261
    %1893 = vst [vmem:[#allocation5 + $0xa70] sm:$0xff] %v1134
    %1894 = vst [vmem:[#allocation5 + $0xa78] sm:$0xff] %v1262
    %1895 = vst [vmem:[#allocation5 + $0xa80] sm:$0xff] %v1135
    %1896 = vst [vmem:[#allocation5 + $0xa88] sm:$0xff] %v1263
    %1897 = vst [vmem:[#allocation5 + $0xa90] sm:$0xff] %v1136
    %1898 = vst [vmem:[#allocation5 + $0xa98] sm:$0xff] %v1264
    %1899 = vst [vmem:[#allocation5 + $0xaa0] sm:$0xff] %v1137
    %1900 = vst [vmem:[#allocation5 + $0xaa8] sm:$0xff] %v1265
    %1901 = vst [vmem:[#allocation5 + $0xab0] sm:$0xff] %v1138
    %1902 = vst [vmem:[#allocation5 + $0xab8] sm:$0xff] %v1266
    %1903 = vst [vmem:[#allocation5 + $0xac0] sm:$0xff] %v1139
    %1904 = vst [vmem:[#allocation5 + $0xac8] sm:$0xff] %v1267
    %1905 = vst [vmem:[#allocation5 + $0xad0] sm:$0xff] %v1140
    %1906 = vst [vmem:[#allocation5 + $0xad8] sm:$0xff] %v1268
    %1907 = vst [vmem:[#allocation5 + $0xae0] sm:$0xff] %v1141
    %1908 = vst [vmem:[#allocation5 + $0xae8] sm:$0xff] %v1269
    %1909 = vst [vmem:[#allocation5 + $0xaf0] sm:$0xff] %v1142
    %1910 = vst [vmem:[#allocation5 + $0xaf8] sm:$0xff] %v1270
    %1911 = vst [vmem:[#allocation5 + $0xb00] sm:$0xff] %v1159
    %1912 = vst [vmem:[#allocation5 + $0xb08] sm:$0xff] %v1287
    %1913 = vst [vmem:[#allocation5 + $0xb10] sm:$0xff] %v1160
    %1914 = vst [vmem:[#allocation5 + $0xb18] sm:$0xff] %v1288
    %1915 = vst [vmem:[#allocation5 + $0xb20] sm:$0xff] %v1161
    %1916 = vst [vmem:[#allocation5 + $0xb28] sm:$0xff] %v1289
    %1917 = vst [vmem:[#allocation5 + $0xb30] sm:$0xff] %v1162
    %1918 = vst [vmem:[#allocation5 + $0xb38] sm:$0xff] %v1290
    %1919 = vst [vmem:[#allocation5 + $0xb40] sm:$0xff] %v1163
    %1920 = vst [vmem:[#allocation5 + $0xb48] sm:$0xff] %v1291
    %1921 = vst [vmem:[#allocation5 + $0xb50] sm:$0xff] %v1164
    %1922 = vst [vmem:[#allocation5 + $0xb58] sm:$0xff] %v1292
    %1923 = vst [vmem:[#allocation5 + $0xb60] sm:$0xff] %v1165
    %1924 = vst [vmem:[#allocation5 + $0xb68] sm:$0xff] %v1293
    %1925 = vst [vmem:[#allocation5 + $0xb70] sm:$0xff] %v1166
    %1926 = vst [vmem:[#allocation5 + $0xb78] sm:$0xff] %v1294
    %1927 = vst [vmem:[#allocation5 + $0xb80] sm:$0xff] %v1167
    %1928 = vst [vmem:[#allocation5 + $0xb88] sm:$0xff] %v1295
    %1929 = vst [vmem:[#allocation5 + $0xb90] sm:$0xff] %v1168
    %1930 = vst [vmem:[#allocation5 + $0xb98] sm:$0xff] %v1296
    %1931 = vst [vmem:[#allocation5 + $0xba0] sm:$0xff] %v1169
    %1932 = vst [vmem:[#allocation5 + $0xba8] sm:$0xff] %v1297
    %1933 = vst [vmem:[#allocation5 + $0xbb0] sm:$0xff] %v1170
    %1934 = vst [vmem:[#allocation5 + $0xbb8] sm:$0xff] %v1298
    %1935 = vst [vmem:[#allocation5 + $0xbc0] sm:$0xff] %v1171
    %1936 = vst [vmem:[#allocation5 + $0xbc8] sm:$0xff] %v1299
    %1937 = vst [vmem:[#allocation5 + $0xbd0] sm:$0xff] %v1172
    %1938 = vst [vmem:[#allocation5 + $0xbd8] sm:$0xff] %v1300
    %1939 = vst [vmem:[#allocation5 + $0xbe0] sm:$0xff] %v1173
    %1940 = vst [vmem:[#allocation5 + $0xbe8] sm:$0xff] %v1301
    %1941 = vst [vmem:[#allocation5 + $0xbf0] sm:$0xff] %v1174
    %1942 = vst [vmem:[#allocation5 + $0xbf8] sm:$0xff] %v1302
    %1943 = vst [vmem:[#allocation5 + $0xc00] sm:$0xff] %v1319
    %1944 = vst [vmem:[#allocation5 + $0xc08] sm:$0xff] %v1447
    %1945 = vst [vmem:[#allocation5 + $0xc10] sm:$0xff] %v1320
    %1946 = vst [vmem:[#allocation5 + $0xc18] sm:$0xff] %v1448
    %1947 = vst [vmem:[#allocation5 + $0xc20] sm:$0xff] %v1321
    %1948 = vst [vmem:[#allocation5 + $0xc28] sm:$0xff] %v1449
    %1949 = vst [vmem:[#allocation5 + $0xc30] sm:$0xff] %v1322
    %1950 = vst [vmem:[#allocation5 + $0xc38] sm:$0xff] %v1450
    %1951 = vst [vmem:[#allocation5 + $0xc40] sm:$0xff] %v1323
    %1952 = vst [vmem:[#allocation5 + $0xc48] sm:$0xff] %v1451
    %1953 = vst [vmem:[#allocation5 + $0xc50] sm:$0xff] %v1324
    %1954 = vst [vmem:[#allocation5 + $0xc58] sm:$0xff] %v1452
    %1955 = vst [vmem:[#allocation5 + $0xc60] sm:$0xff] %v1325
    %1956 = vst [vmem:[#allocation5 + $0xc68] sm:$0xff] %v1453
    %1957 = vst [vmem:[#allocation5 + $0xc70] sm:$0xff] %v1326
    %1958 = vst [vmem:[#allocation5 + $0xc78] sm:$0xff] %v1454
    %1959 = vst [vmem:[#allocation5 + $0xc80] sm:$0xff] %v1327
    %1960 = vst [vmem:[#allocation5 + $0xc88] sm:$0xff] %v1455
    %1961 = vst [vmem:[#allocation5 + $0xc90] sm:$0xff] %v1328
    %1962 = vst [vmem:[#allocation5 + $0xc98] sm:$0xff] %v1456
    %1963 = vst [vmem:[#allocation5 + $0xca0] sm:$0xff] %v1329
    %1964 = vst [vmem:[#allocation5 + $0xca8] sm:$0xff] %v1457
    %1965 = vst [vmem:[#allocation5 + $0xcb0] sm:$0xff] %v1330
    %1966 = vst [vmem:[#allocation5 + $0xcb8] sm:$0xff] %v1458
    %1967 = vst [vmem:[#allocation5 + $0xcc0] sm:$0xff] %v1331
    %1968 = vst [vmem:[#allocation5 + $0xcc8] sm:$0xff] %v1459
    %1969 = vst [vmem:[#allocation5 + $0xcd0] sm:$0xff] %v1332
    %1970 = vst [vmem:[#allocation5 + $0xcd8] sm:$0xff] %v1460
    %1971 = vst [vmem:[#allocation5 + $0xce0] sm:$0xff] %v1333
    %1972 = vst [vmem:[#allocation5 + $0xce8] sm:$0xff] %v1461
    %1973 = vst [vmem:[#allocation5 + $0xcf0] sm:$0xff] %v1334
    %1974 = vst [vmem:[#allocation5 + $0xcf8] sm:$0xff] %v1462
    %1975 = vst [vmem:[#allocation5 + $0xd00] sm:$0xff] %v1351
    %1976 = vst [vmem:[#allocation5 + $0xd08] sm:$0xff] %v1479
    %1977 = vst [vmem:[#allocation5 + $0xd10] sm:$0xff] %v1352
    %1978 = vst [vmem:[#allocation5 + $0xd18] sm:$0xff] %v1480
    %1979 = vst [vmem:[#allocation5 + $0xd20] sm:$0xff] %v1353
    %1980 = vst [vmem:[#allocation5 + $0xd28] sm:$0xff] %v1481
    %1981 = vst [vmem:[#allocation5 + $0xd30] sm:$0xff] %v1354
    %1982 = vst [vmem:[#allocation5 + $0xd38] sm:$0xff] %v1482
    %1983 = vst [vmem:[#allocation5 + $0xd40] sm:$0xff] %v1355
    %1984 = vst [vmem:[#allocation5 + $0xd48] sm:$0xff] %v1483
    %1985 = vst [vmem:[#allocation5 + $0xd50] sm:$0xff] %v1356
    %1986 = vst [vmem:[#allocation5 + $0xd58] sm:$0xff] %v1484
    %1987 = vst [vmem:[#allocation5 + $0xd60] sm:$0xff] %v1357
    %1988 = vst [vmem:[#allocation5 + $0xd68] sm:$0xff] %v1485
    %1989 = vst [vmem:[#allocation5 + $0xd70] sm:$0xff] %v1358
    %1990 = vst [vmem:[#allocation5 + $0xd78] sm:$0xff] %v1486
    %1991 = vst [vmem:[#allocation5 + $0xd80] sm:$0xff] %v1359
    %1992 = vst [vmem:[#allocation5 + $0xd88] sm:$0xff] %v1487
    %1993 = vst [vmem:[#allocation5 + $0xd90] sm:$0xff] %v1360
    %1994 = vst [vmem:[#allocation5 + $0xd98] sm:$0xff] %v1488
    %1995 = vst [vmem:[#allocation5 + $0xda0] sm:$0xff] %v1361
    %1996 = vst [vmem:[#allocation5 + $0xda8] sm:$0xff] %v1489
    %1997 = vst [vmem:[#allocation5 + $0xdb0] sm:$0xff] %v1362
    %1998 = vst [vmem:[#allocation5 + $0xdb8] sm:$0xff] %v1490
    %1999 = vst [vmem:[#allocation5 + $0xdc0] sm:$0xff] %v1363
    %2000 = vst [vmem:[#allocation5 + $0xdc8] sm:$0xff] %v1491
    %2001 = vst [vmem:[#allocation5 + $0xdd0] sm:$0xff] %v1364
    %2002 = vst [vmem:[#allocation5 + $0xdd8] sm:$0xff] %v1492
    %2003 = vst [vmem:[#allocation5 + $0xde0] sm:$0xff] %v1365
    %2004 = vst [vmem:[#allocation5 + $0xde8] sm:$0xff] %v1493
    %2005 = vst [vmem:[#allocation5 + $0xdf0] sm:$0xff] %v1366
    %2006 = vst [vmem:[#allocation5 + $0xdf8] sm:$0xff] %v1494
    %2007 = vst [vmem:[#allocation5 + $0xe00] sm:$0xff] %v1383
    %2008 = vst [vmem:[#allocation5 + $0xe08] sm:$0xff] %v1511
    %2009 = vst [vmem:[#allocation5 + $0xe10] sm:$0xff] %v1384
    %2010 = vst [vmem:[#allocation5 + $0xe18] sm:$0xff] %v1512
    %2011 = vst [vmem:[#allocation5 + $0xe20] sm:$0xff] %v1385
    %2012 = vst [vmem:[#allocation5 + $0xe28] sm:$0xff] %v1513
    %2013 = vst [vmem:[#allocation5 + $0xe30] sm:$0xff] %v1386
    %2014 = vst [vmem:[#allocation5 + $0xe38] sm:$0xff] %v1514
    %2015 = vst [vmem:[#allocation5 + $0xe40] sm:$0xff] %v1387
    %2016 = vst [vmem:[#allocation5 + $0xe48] sm:$0xff] %v1515
    %2017 = vst [vmem:[#allocation5 + $0xe50] sm:$0xff] %v1388
    %2018 = vst [vmem:[#allocation5 + $0xe58] sm:$0xff] %v1516
    %2019 = vst [vmem:[#allocation5 + $0xe60] sm:$0xff] %v1389
    %2020 = vst [vmem:[#allocation5 + $0xe68] sm:$0xff] %v1517
    %2021 = vst [vmem:[#allocation5 + $0xe70] sm:$0xff] %v1390
    %2022 = vst [vmem:[#allocation5 + $0xe78] sm:$0xff] %v1518
    %2023 = vst [vmem:[#allocation5 + $0xe80] sm:$0xff] %v1391
    %2024 = vst [vmem:[#allocation5 + $0xe88] sm:$0xff] %v1519
    %2025 = vst [vmem:[#allocation5 + $0xe90] sm:$0xff] %v1392
    %2026 = vst [vmem:[#allocation5 + $0xe98] sm:$0xff] %v1520
    %2027 = vst [vmem:[#allocation5 + $0xea0] sm:$0xff] %v1393
    %2028 = vst [vmem:[#allocation5 + $0xea8] sm:$0xff] %v1521
    %2029 = vst [vmem:[#allocation5 + $0xeb0] sm:$0xff] %v1394
    %2030 = vst [vmem:[#allocation5 + $0xeb8] sm:$0xff] %v1522
    %2031 = vst [vmem:[#allocation5 + $0xec0] sm:$0xff] %v1395
    %2032 = vst [vmem:[#allocation5 + $0xec8] sm:$0xff] %v1523
    %2033 = vst [vmem:[#allocation5 + $0xed0] sm:$0xff] %v1396
    %2034 = vst [vmem:[#allocation5 + $0xed8] sm:$0xff] %v1524
    %2035 = vst [vmem:[#allocation5 + $0xee0] sm:$0xff] %v1397
    %2036 = vst [vmem:[#allocation5 + $0xee8] sm:$0xff] %v1525
    %2037 = vst [vmem:[#allocation5 + $0xef0] sm:$0xff] %v1398
    %2038 = vst [vmem:[#allocation5 + $0xef8] sm:$0xff] %v1526
    %2039 = vst [vmem:[#allocation5 + $0xf00] sm:$0xff] %v1415
    %2040 = vst [vmem:[#allocation5 + $0xf08] sm:$0xff] %v1543
    %2041 = vst [vmem:[#allocation5 + $0xf10] sm:$0xff] %v1416
    %2042 = vst [vmem:[#allocation5 + $0xf18] sm:$0xff] %v1544
    %2043 = vst [vmem:[#allocation5 + $0xf20] sm:$0xff] %v1417
    %2044 = vst [vmem:[#allocation5 + $0xf28] sm:$0xff] %v1545
    %2045 = vst [vmem:[#allocation5 + $0xf30] sm:$0xff] %v1418
    %2046 = vst [vmem:[#allocation5 + $0xf38] sm:$0xff] %v1546
    %2047 = vst [vmem:[#allocation5 + $0xf40] sm:$0xff] %v1419
    %2048 = vst [vmem:[#allocation5 + $0xf48] sm:$0xff] %v1547
    %2049 = vst [vmem:[#allocation5 + $0xf50] sm:$0xff] %v1420
    %2050 = vst [vmem:[#allocation5 + $0xf58] sm:$0xff] %v1548
    %2051 = vst [vmem:[#allocation5 + $0xf60] sm:$0xff] %v1421
    %2052 = vst [vmem:[#allocation5 + $0xf68] sm:$0xff] %v1549
    %2053 = vst [vmem:[#allocation5 + $0xf70] sm:$0xff] %v1422
    %2054 = vst [vmem:[#allocation5 + $0xf78] sm:$0xff] %v1550
    %2055 = vst [vmem:[#allocation5 + $0xf80] sm:$0xff] %v1423
    %2056 = vst [vmem:[#allocation5 + $0xf88] sm:$0xff] %v1551
    %2057 = vst [vmem:[#allocation5 + $0xf90] sm:$0xff] %v1424
    %2058 = vst [vmem:[#allocation5 + $0xf98] sm:$0xff] %v1552
    %2059 = vst [vmem:[#allocation5 + $0xfa0] sm:$0xff] %v1425
    %2060 = vst [vmem:[#allocation5 + $0xfa8] sm:$0xff] %v1553
    %2061 = vst [vmem:[#allocation5 + $0xfb0] sm:$0xff] %v1426
    %2062 = vst [vmem:[#allocation5 + $0xfb8] sm:$0xff] %v1554
    %2063 = vst [vmem:[#allocation5 + $0xfc0] sm:$0xff] %v1427
    %2064 = vst [vmem:[#allocation5 + $0xfc8] sm:$0xff] %v1555
    %2065 = vst [vmem:[#allocation5 + $0xfd0] sm:$0xff] %v1428
    %2066 = vst [vmem:[#allocation5 + $0xfd8] sm:$0xff] %v1556
    %2067 = vst [vmem:[#allocation5 + $0xfe0] sm:$0xff] %v1429
    %2068 = vst [vmem:[#allocation5 + $0xfe8] sm:$0xff] %v1557
    %2069 = vst [vmem:[#allocation5 + $0xff0] sm:$0xff] %v1430
    %2070 = vst [vmem:[#allocation5 + $0xff8] sm:$0xff] %v1558
    // Predicated region
    $region10: #{tpu_custom_call.1} parent=1 // pred_check
      _
    $region11: #{tpu_custom_call.1} parent=1 // pred_check_branch
      %2072 = sbr.rel (0) target = $region13
    $region12: #{tpu_custom_call.1} parent=1 // pred_region
      %s2074 = ssub.s32 65536, 65536
      %2075 = vsyncadd [#allocation4], %s2074
      %s2076 = sshll.u32 [#allocation5], 4
      %s2077 = int_to_ptr.vmem [resolvable:$true] %s2076
      %2082 = dma.vmem_to_hbm [thread:$0]  %s2077, 65536, %s1, [#allocation4], 256, 256, 16
    $region13: #{tpu_custom_call.1} parent=1 // pred_fallthru
      _
    // Predicated region
    $region14: #{tpu_custom_call.1} parent=1 // pred_check
      _
    $region15: #{tpu_custom_call.1} parent=1 // pred_check_branch
      %2084 = sbr.rel (0) target = $region17
    $region16: #{tpu_custom_call.1} parent=1 // pred_region
      %2085 = dma.done [#allocation4], 65536
    $region17: #{tpu_custom_call.1} parent=1 // pred_fallthru
      _
    %2086 = vsyncpa [#allocation3], 1
    %2087 = vsyncpa [#allocation4], 1

</llo_original>
